<compile_context>
chip_gen: v7x
topology: tpu7x:2x2x1
jax: 0.10.0
libtpu: 0.0.40
codegen_flags: <defaults>
</compile_context>

<pallas_src>
import functools

import jax
import jax.numpy as jnp
import numpy as np
from jax.experimental import pallas as pl
from jax.experimental.pallas import tpu as pltpu


def _mha_kernel(x_ref, wqkv_ref, bqkv_ref, wo_ref, bo_ref, o_ref, *, num_heads):
    x = x_ref[0]                      # (S, E) slab for this batch element
    S, E = x.shape
    H = num_heads
    Dh = E // H

    # Fused Q/K/V projection: one MXU push. Weight is already (in, 3*out) and the
    # q-part is pre-scaled by 1/sqrt(Dh).
    qkv = jnp.dot(x, wqkv_ref[...], preferred_element_type=jnp.float32) + bqkv_ref[0]  # (S, 3E)

    # Head-major (H, S, Dh) views: static lane slices stacked along a new leading
    # axis (no minor-dim concatenate on the hot path, no in-kernel transpose).
    def split_heads(base):
        return jnp.stack(
            [qkv[:, base + h * Dh: base + (h + 1) * Dh] for h in range(H)], axis=0)

    q = split_heads(0)          # (H, S, Dh), already scaled via wq/bq
    k = split_heads(E)          # (H, S, Dh)
    v = split_heads(2 * E)      # (H, S, Dh)

    # Head-batched scaled-dot-product attention, softmax over keys.
    s = jnp.einsum('hsd,htd->hst', q, k, preferred_element_type=jnp.float32)   # (H,S,S)
    s = s - jnp.max(s, axis=-1, keepdims=True)
    p = jnp.exp(s)
    p = p * pl.reciprocal(jnp.sum(p, axis=-1, keepdims=True), approx=True)
    ao = jnp.einsum('hst,htd->hsd', p, v, preferred_element_type=jnp.float32)  # (H,S,Dh)

    # Output projection straight from head-major layout: contract Dh against the
    # head-split weight (H, Dh, E), then reduce over heads. Equivalent to
    # concat(heads) @ Wo^T + bo without the lane-dim concatenate.
    per_head = jnp.einsum('hsd,hde->hse', ao, wo_ref[...],
                          preferred_element_type=jnp.float32)                  # (H,S,E)
    out = per_head[0]
    for h in range(1, H):
        out = out + per_head[h]
    out = out + bo_ref[0]                                                      # (S, E)
    o_ref[0] = out.astype(o_ref.dtype)


def prepare_params(params, num_heads):
    """One-time parameter prep: transpose to (in,out), fuse QKV, fold the scale,
    split the output projection by head. PyTorch nn.Linear layout in, MXU-ready out."""
    E = params["wq"].shape[0]
    Dh = E // num_heads
    scale = 1.0 / (Dh ** 0.5)
    wqkv = jnp.concatenate(
        [params["wq"].T * scale, params["wk"].T, params["wv"].T], axis=1)       # (E, 3E)
    bqkv = jnp.concatenate(
        [params["bq"] * scale, params["bk"], params["bv"]]).reshape(1, 3 * E)   # (1, 3E)
    wo_heads = params["wo"].T.reshape(num_heads, Dh, E)                         # (H, Dh, E)
    bo = params["bo"].reshape(1, E)                                             # (1, E)
    return wqkv, bqkv, wo_heads, bo


def scaled_rope_attention(x, prepared, num_heads):
    """x: (B, S, E) float32. prepared: output of prepare_params()."""
    B, S, E = x.shape
    H = num_heads
    Dh = E // H
    wqkv, bqkv, wo_heads, bo = prepared

    kernel = functools.partial(_mha_kernel, num_heads=num_heads)

    return pl.pallas_call(
        kernel,
        out_shape=jax.ShapeDtypeStruct((B, S, E), x.dtype),
        grid_spec=pltpu.PrefetchScalarGridSpec(
            num_scalar_prefetch=0,
            grid=(B,),
            in_specs=[
                pl.BlockSpec((1, S, E), lambda b: (b, 0, 0)),
                pl.BlockSpec((E, 3 * E), lambda b: (0, 0)),
                pl.BlockSpec((1, 3 * E), lambda b: (0, 0)),
                pl.BlockSpec((H, Dh, E), lambda b: (0, 0, 0)),
                pl.BlockSpec((1, E), lambda b: (0, 0)),
            ],
            out_specs=pl.BlockSpec((1, S, E), lambda b: (b, 0, 0)),
        ),
        compiler_params=pltpu.CompilerParams(
            dimension_semantics=("parallel",)),
    )(x, wqkv, bqkv, wo_heads, bo)


def _reference(x, params, num_heads):
    """Pure-JAX reference matching the PyTorch module semantics exactly."""
    B, S, E = x.shape
    Dh = E // num_heads

    def lin(x, w, b):
        return jnp.einsum("bse,oe->bso", x, w) + b

    q = lin(x, params["wq"], params["bq"])
    k = lin(x, params["wk"], params["bk"])
    v = lin(x, params["wv"], params["bv"])
    q = q.reshape(B, S, num_heads, Dh).transpose(0, 2, 1, 3)
    k = k.reshape(B, S, num_heads, Dh).transpose(0, 2, 1, 3)
    v = v.reshape(B, S, num_heads, Dh).transpose(0, 2, 1, 3)
    aw = jnp.einsum("bhsd,bhtd->bhst", q, k) / (Dh ** 0.5)
    aw = jax.nn.softmax(aw, axis=-1)
    ao = jnp.einsum("bhst,bhtd->bhsd", aw, v)
    ao = ao.transpose(0, 2, 1, 3).reshape(B, S, E)
    return lin(ao, params["wo"], params["bo"])


if __name__ == "__main__":
    # Small shapes consistent with the module: batch=2, seq=8, embed=32, heads=4.
    B, S, E, H = 2, 8, 32, 4
    key = jax.random.PRNGKey(0)
    keys = jax.random.split(key, 9)
    scale = 1.0 / np.sqrt(E)

    params = {
        "wq": jax.random.uniform(keys[0], (E, E), jnp.float32, -scale, scale),
        "bq": jax.random.uniform(keys[1], (E,), jnp.float32, -scale, scale),
        "wk": jax.random.uniform(keys[2], (E, E), jnp.float32, -scale, scale),
        "bk": jax.random.uniform(keys[3], (E,), jnp.float32, -scale, scale),
        "wv": jax.random.uniform(keys[4], (E, E), jnp.float32, -scale, scale),
        "bv": jax.random.uniform(keys[5], (E,), jnp.float32, -scale, scale),
        "wo": jax.random.uniform(keys[6], (E, E), jnp.float32, -scale, scale),
        "bo": jax.random.uniform(keys[7], (E,), jnp.float32, -scale, scale),
    }
    x = jax.random.normal(keys[8], (B, S, E), jnp.float32)

    prepared = prepare_params(params, H)
    out = scaled_rope_attention(x, prepared, H)
    out = jax.block_until_ready(out)

    ref = _reference(x, params, H)
    # Tolerance allows for the EUP approximate-reciprocal softmax normalization.
    np.testing.assert_allclose(np.asarray(out), np.asarray(ref), atol=2e-3, rtol=2e-3)

    print("KERNEL_OK")
</pallas_src>

<mosaic_0001>
module attributes {stable_mosaic.version = 11 : i64} {
  func.func @_mha_kernel(%arg0: i32, %arg1: memref<1x8x32xf32, #tpu.memory_space<vmem>>, %arg2: memref<32x96xf32, #tpu.memory_space<vmem>>, %arg3: memref<1x96xf32, #tpu.memory_space<vmem>>, %arg4: memref<4x8x32xf32, #tpu.memory_space<vmem>>, %arg5: memref<1x32xf32, #tpu.memory_space<vmem>>, %arg6: memref<1x8x32xf32, #tpu.memory_space<vmem>>) attributes {dimension_semantics = [#tpu.dimension_semantics<parallel>], iteration_bounds = array<i64: 2>, scalar_prefetch = 0 : i64, scratch_operands = 0 : i64, tpu.core_type = #tpu.core_type<tc>, window_params = [{transform_indices = @transform_0, window_bounds = array<i64: 1, 8, 32>}, {pipeline_mode = #tpu.pipeline_mode<synchronous>, transform_indices = @transform_1, window_bounds = array<i64: 32, 96>}, {pipeline_mode = #tpu.pipeline_mode<synchronous>, transform_indices = @transform_2, window_bounds = array<i64: 1, 96>}, {pipeline_mode = #tpu.pipeline_mode<synchronous>, transform_indices = @transform_3, window_bounds = array<i64: 4, 8, 32>}, {pipeline_mode = #tpu.pipeline_mode<synchronous>, transform_indices = @transform_4, window_bounds = array<i64: 1, 32>}, {transform_indices = @transform_5, window_bounds = array<i64: 1, 8, 32>}]} {
    %c0 = arith.constant 0 : index
    %c0_0 = arith.constant 0 : index
    %c0_1 = arith.constant 0 : index
    %0 = vector.load %arg1[%c0, %c0_0, %c0_1] : memref<1x8x32xf32, #tpu.memory_space<vmem>>, vector<1x8x32xf32>
    %1 = vector.shape_cast %0 : vector<1x8x32xf32> to vector<8x32xf32>
    %c0_2 = arith.constant 0 : index
    %c0_3 = arith.constant 0 : index
    %2 = vector.load %arg2[%c0_2, %c0_3] : memref<32x96xf32, #tpu.memory_space<vmem>>, vector<32x96xf32>
    %cst = arith.constant dense<0.000000e+00> : vector<8x96xf32>
    %3 = tpu.matmul %1, %2, %cst {dimension_numbers = #tpu.dot_dimension_numbers<[1], [0], [0], [1], [0, 0, 1, 1], [], []>} : vector<8x32xf32>, vector<32x96xf32>, vector<8x96xf32> -> vector<8x96xf32>
    %c0_4 = arith.constant 0 : index
    %c0_5 = arith.constant 0 : index
    %4 = vector.load %arg3[%c0_4, %c0_5] : memref<1x96xf32, #tpu.memory_space<vmem>>, vector<1x96xf32>
    %5 = vector.shape_cast %4 : vector<1x96xf32> to vector<96xf32>
    %6 = vector.shape_cast %5 : vector<96xf32> to vector<1x96xf32>
    %7 = vector.broadcast %6 : vector<1x96xf32> to vector<8x96xf32>
    %8 = arith.addf %3, %7 : vector<8x96xf32>
    %9 = vector.extract_strided_slice %8 {offsets = [0, 0], sizes = [8, 8], strides = [1, 1]} : vector<8x96xf32> to vector<8x8xf32>
    %10 = vector.extract_strided_slice %8 {offsets = [0, 8], sizes = [8, 8], strides = [1, 1]} : vector<8x96xf32> to vector<8x8xf32>
    %11 = vector.extract_strided_slice %8 {offsets = [0, 16], sizes = [8, 8], strides = [1, 1]} : vector<8x96xf32> to vector<8x8xf32>
    %12 = vector.extract_strided_slice %8 {offsets = [0, 24], sizes = [8, 8], strides = [1, 1]} : vector<8x96xf32> to vector<8x8xf32>
    %13 = vector.shape_cast %9 : vector<8x8xf32> to vector<1x8x8xf32>
    %14 = vector.shape_cast %10 : vector<8x8xf32> to vector<1x8x8xf32>
    %15 = vector.shape_cast %11 : vector<8x8xf32> to vector<1x8x8xf32>
    %16 = vector.shape_cast %12 : vector<8x8xf32> to vector<1x8x8xf32>
    %17 = tpu.concatenate %13, %14, %15, %16 in 0 : vector<1x8x8xf32>, vector<1x8x8xf32>, vector<1x8x8xf32>, vector<1x8x8xf32> -> vector<4x8x8xf32>
    %18 = vector.extract_strided_slice %8 {offsets = [0, 32], sizes = [8, 8], strides = [1, 1]} : vector<8x96xf32> to vector<8x8xf32>
    %19 = vector.extract_strided_slice %8 {offsets = [0, 40], sizes = [8, 8], strides = [1, 1]} : vector<8x96xf32> to vector<8x8xf32>
    %20 = vector.extract_strided_slice %8 {offsets = [0, 48], sizes = [8, 8], strides = [1, 1]} : vector<8x96xf32> to vector<8x8xf32>
    %21 = vector.extract_strided_slice %8 {offsets = [0, 56], sizes = [8, 8], strides = [1, 1]} : vector<8x96xf32> to vector<8x8xf32>
    %22 = vector.shape_cast %18 : vector<8x8xf32> to vector<1x8x8xf32>
    %23 = vector.shape_cast %19 : vector<8x8xf32> to vector<1x8x8xf32>
    %24 = vector.shape_cast %20 : vector<8x8xf32> to vector<1x8x8xf32>
    %25 = vector.shape_cast %21 : vector<8x8xf32> to vector<1x8x8xf32>
    %26 = tpu.concatenate %22, %23, %24, %25 in 0 : vector<1x8x8xf32>, vector<1x8x8xf32>, vector<1x8x8xf32>, vector<1x8x8xf32> -> vector<4x8x8xf32>
    %27 = vector.extract_strided_slice %8 {offsets = [0, 64], sizes = [8, 8], strides = [1, 1]} : vector<8x96xf32> to vector<8x8xf32>
    %28 = vector.extract_strided_slice %8 {offsets = [0, 72], sizes = [8, 8], strides = [1, 1]} : vector<8x96xf32> to vector<8x8xf32>
    %29 = vector.extract_strided_slice %8 {offsets = [0, 80], sizes = [8, 8], strides = [1, 1]} : vector<8x96xf32> to vector<8x8xf32>
    %30 = vector.extract_strided_slice %8 {offsets = [0, 88], sizes = [8, 8], strides = [1, 1]} : vector<8x96xf32> to vector<8x8xf32>
    %31 = vector.shape_cast %27 : vector<8x8xf32> to vector<1x8x8xf32>
    %32 = vector.shape_cast %28 : vector<8x8xf32> to vector<1x8x8xf32>
    %33 = vector.shape_cast %29 : vector<8x8xf32> to vector<1x8x8xf32>
    %34 = vector.shape_cast %30 : vector<8x8xf32> to vector<1x8x8xf32>
    %35 = tpu.concatenate %31, %32, %33, %34 in 0 : vector<1x8x8xf32>, vector<1x8x8xf32>, vector<1x8x8xf32>, vector<1x8x8xf32> -> vector<4x8x8xf32>
    "tpu.trace_start"() <{level = 10 : i32, message = "hsd,htd->hst"}> : () -> ()
    %cst_6 = arith.constant dense<0.000000e+00> : vector<4x8x8xf32>
    %36 = tpu.matmul %17, %26, %cst_6 {dimension_numbers = #tpu.dot_dimension_numbers<[2], [2], [1], [1], [0, 0, 0, 1, 1, 1], [0], [0]>} : vector<4x8x8xf32>, vector<4x8x8xf32>, vector<4x8x8xf32> -> vector<4x8x8xf32>
    "tpu.trace_stop"() : () -> ()
    %cst_7 = arith.constant dense<0xFF800000> : vector<4x8xf32>
    %37 = vector.multi_reduction <maximumf>, %36, %cst_7 [2] : vector<4x8x8xf32> to vector<4x8xf32>
    %38 = vector.shape_cast %37 : vector<4x8xf32> to vector<4x8x1xf32>
    %39 = vector.broadcast %38 : vector<4x8x1xf32> to vector<4x8x8xf32>
    %40 = arith.subf %36, %39 : vector<4x8x8xf32>
    %41 = math.exp %40 : vector<4x8x8xf32>
    %cst_8 = arith.constant dense<0.000000e+00> : vector<4x8xf32>
    %42 = vector.multi_reduction <add>, %41, %cst_8 [2] : vector<4x8x8xf32> to vector<4x8xf32>
    %43 = vector.shape_cast %42 : vector<4x8xf32> to vector<4x8x1xf32>
    %44 = tpu.reciprocal %43 {approx = true} : vector<4x8x1xf32> -> vector<4x8x1xf32>
    %45 = vector.broadcast %44 : vector<4x8x1xf32> to vector<4x8x8xf32>
    %46 = arith.mulf %41, %45 : vector<4x8x8xf32>
    "tpu.trace_start"() <{level = 10 : i32, message = "hst,htd->hsd"}> : () -> ()
    %cst_9 = arith.constant dense<0.000000e+00> : vector<4x8x8xf32>
    %47 = tpu.matmul %46, %35, %cst_9 {dimension_numbers = #tpu.dot_dimension_numbers<[2], [1], [1], [2], [0, 0, 0, 1, 1, 2], [0], [0]>} : vector<4x8x8xf32>, vector<4x8x8xf32>, vector<4x8x8xf32> -> vector<4x8x8xf32>
    "tpu.trace_stop"() : () -> ()
    %c0_10 = arith.constant 0 : index
    %c0_11 = arith.constant 0 : index
    %c0_12 = arith.constant 0 : index
    %48 = vector.load %arg4[%c0_10, %c0_11, %c0_12] : memref<4x8x32xf32, #tpu.memory_space<vmem>>, vector<4x8x32xf32>
    "tpu.trace_start"() <{level = 10 : i32, message = "hsd,hde->hse"}> : () -> ()
    %cst_13 = arith.constant dense<0.000000e+00> : vector<4x8x32xf32>
    %49 = tpu.matmul %47, %48, %cst_13 {dimension_numbers = #tpu.dot_dimension_numbers<[2], [1], [1], [2], [0, 0, 0, 1, 1, 2], [0], [0]>} : vector<4x8x8xf32>, vector<4x8x32xf32>, vector<4x8x32xf32> -> vector<4x8x32xf32>
    "tpu.trace_stop"() : () -> ()
    %50 = vector.extract_strided_slice %49 {offsets = [0, 0, 0], sizes = [1, 8, 32], strides = [1, 1, 1]} : vector<4x8x32xf32> to vector<1x8x32xf32>
    %51 = vector.shape_cast %50 : vector<1x8x32xf32> to vector<8x32xf32>
    %52 = vector.extract_strided_slice %49 {offsets = [1, 0, 0], sizes = [1, 8, 32], strides = [1, 1, 1]} : vector<4x8x32xf32> to vector<1x8x32xf32>
    %53 = vector.shape_cast %52 : vector<1x8x32xf32> to vector<8x32xf32>
    %54 = arith.addf %51, %53 : vector<8x32xf32>
    %55 = vector.extract_strided_slice %49 {offsets = [2, 0, 0], sizes = [1, 8, 32], strides = [1, 1, 1]} : vector<4x8x32xf32> to vector<1x8x32xf32>
    %56 = vector.shape_cast %55 : vector<1x8x32xf32> to vector<8x32xf32>
    %57 = arith.addf %54, %56 : vector<8x32xf32>
    %58 = vector.extract_strided_slice %49 {offsets = [3, 0, 0], sizes = [1, 8, 32], strides = [1, 1, 1]} : vector<4x8x32xf32> to vector<1x8x32xf32>
    %59 = vector.shape_cast %58 : vector<1x8x32xf32> to vector<8x32xf32>
    %60 = arith.addf %57, %59 : vector<8x32xf32>
    %c0_14 = arith.constant 0 : index
    %c0_15 = arith.constant 0 : index
    %61 = vector.load %arg5[%c0_14, %c0_15] : memref<1x32xf32, #tpu.memory_space<vmem>>, vector<1x32xf32>
    %62 = vector.shape_cast %61 : vector<1x32xf32> to vector<32xf32>
    %63 = vector.shape_cast %62 : vector<32xf32> to vector<1x32xf32>
    %64 = vector.broadcast %63 : vector<1x32xf32> to vector<8x32xf32>
    %65 = arith.addf %60, %64 : vector<8x32xf32>
    %c0_16 = arith.constant 0 : index
    %c0_17 = arith.constant 0 : index
    %c0_18 = arith.constant 0 : index
    %66 = vector.load %arg6[%c0_16, %c0_17, %c0_18] : memref<1x8x32xf32, #tpu.memory_space<vmem>>, vector<1x8x32xf32>
    %67 = vector.shape_cast %66 : vector<1x8x32xf32> to vector<8x32xf32>
    %68 = vector.shape_cast %65 : vector<8x32xf32> to vector<1x8x32xf32>
    tpu.vector_store %arg6[%c0_16, %c0_17, %c0_18], %68 {strides = array<i32>} : memref<1x8x32xf32, #tpu.memory_space<vmem>>, vector<1x8x32xf32>,
    return
  }
  func.func @transform_0(%arg0: i32) -> (i32, i32, i32) {
    %c0_i32 = arith.constant 0 : i32
    %c0_i32_0 = arith.constant 0 : i32
    %c0_i32_1 = arith.constant 0 : i32
    return %arg0, %c0_i32, %c0_i32_0 : i32, i32, i32
  }
  func.func @transform_1(%arg0: i32) -> (i32, i32) {
    %c0_i32 = arith.constant 0 : i32
    %c0_i32_0 = arith.constant 0 : i32
    %c0_i32_1 = arith.constant 0 : i32
    return %c0_i32, %c0_i32_0 : i32, i32
  }
  func.func @transform_2(%arg0: i32) -> (i32, i32) {
    %c0_i32 = arith.constant 0 : i32
    %c0_i32_0 = arith.constant 0 : i32
    %c0_i32_1 = arith.constant 0 : i32
    return %c0_i32, %c0_i32_0 : i32, i32
  }
  func.func @transform_3(%arg0: i32) -> (i32, i32, i32) {
    %c0_i32 = arith.constant 0 : i32
    %c0_i32_0 = arith.constant 0 : i32
    %c0_i32_1 = arith.constant 0 : i32
    %c0_i32_2 = arith.constant 0 : i32
    return %c0_i32, %c0_i32_0, %c0_i32_1 : i32, i32, i32
  }
  func.func @transform_4(%arg0: i32) -> (i32, i32) {
    %c0_i32 = arith.constant 0 : i32
    %c0_i32_0 = arith.constant 0 : i32
    %c0_i32_1 = arith.constant 0 : i32
    return %c0_i32, %c0_i32_0 : i32, i32
  }
  func.func @transform_5(%arg0: i32) -> (i32, i32, i32) {
    %c0_i32 = arith.constant 0 : i32
    %c0_i32_0 = arith.constant 0 : i32
    %c0_i32_1 = arith.constant 0 : i32
    return %arg0, %c0_i32, %c0_i32_0 : i32, i32, i32
  }
}

</mosaic_0001>

<llo_original>
// kernel: tpu_custom_call.1
$region0: #{tpu_custom_call.1}
  #allocation0 [shape = 'u32[]', space=smem, size = 0x4, offset = 0x4, fixed_abs, tag = 'smem constant byte address 0x4 - core index']
  #allocation1 [shape = 'u32[144,128]{1,0:T(1,128)}', space=vmem, size = 0x12000, scoped, tag = 'internal scratch']
  %s0 = inlined_call_operand.hbm [shape: f32[2,8,32], index: 0, kind: input, shape index: {}]
  %s1 = inlined_call_operand.hbm [shape: f32[32,96], index: 1, kind: input, shape index: {}]
  %s2 = inlined_call_operand.vmem [shape: f32[1,96], index: 2, kind: input, shape index: {}]
  %s3 = inlined_call_operand.hbm [shape: f32[4,8,32], index: 3, kind: input, shape index: {}]
  %s4 = inlined_call_operand.vmem [shape: f32[1,32], index: 4, kind: input, shape index: {}]
  %s5 = inlined_call_operand.hbm [shape: f32[2,8,32], index: 5, kind: output, shape index: {}]
  %s6 = sld [smem:[#allocation0]]
  $region65: #{tpu_custom_call.1} parent=0
    _
  %s8 = ssub.s32 1, %s6
  %s9 = scalar_select 0, %s8, %s6
  $region1: #{tpu_custom_call.1} parent=0
    #allocation2 [shape = 'u8[8192]{0}', space=vmem, size = 0x2000, scoped, tag = 'input window, operand 0']
    #allocation3 [shape = 's32[2]{0}', space=sflag, size = 0x8, scoped, tag = 'scoped memory for tpu_custom_call.1']
    #allocation4 [shape = 's32[2]{0}', space=sflag, size = 0x8, scoped, tag = 'scoped memory for tpu_custom_call.1']
    #allocation5 [shape = 'u8[16384]{0}', space=vmem, size = 0x4000, scoped, tag = 'input window, operand 1, single buffered']
    #allocation6 [shape = 's32[1]{0}', space=sflag, size = 0x4, scoped, tag = 'scoped memory for tpu_custom_call.1']
    #allocation7 [shape = 'u8[16384]{0}', space=vmem, size = 0x4000, scoped, tag = 'input window, operand 3, single buffered']
    #allocation8 [shape = 'u8[8192]{0}', space=vmem, size = 0x2000, scoped, tag = 'output window, operand 0']
    %10 = vsyncpa [#allocation3], 0
    %s11 = scalar_lea.sflag [#allocation3], 1
    %12 = vsyncpa %s11, 0
    %13 = vsyncpa [#allocation6], 0
    %14 = vsyncpa [#allocation4], 0
    %s15 = scalar_lea.sflag [#allocation4], 1
    %16 = vsyncpa %s15, 0
    loop: start=0, step=1, limit=4
    $region2: #{tpu_custom_call.1} parent=1 // loop_pre_header
      _
    $region3: #{tpu_custom_call.1} parent=1 // loop_header
      %s18 = sphi 0, %s22
      %p19 = scmp.ge.s32.totalorder %s18, 4
      %s28 = sphi 0, %s30
      %s31 = sphi 0, %s28
      %s32 = sphi 0, %s31
      %s48 = sphi 0, %s32
      %s52 = sphi 0, %s52
      %s54 = sphi 0, %s52
      %s55 = sphi 0, %s54
      %s69 = sphi 0, %s55
      %s73 = sphi 0, %s73
      %s75 = sphi 0, %s73
      %s76 = sphi 0, %s75
      %s90 = sphi 0, %s76
      %s94 = sphi 0, %s94
      %s96 = sphi 0, %s94
      %s97 = sphi 0, %s96
      %s111 = sphi 0, %s97
      %s115 = sphi 0, %s115
      %s117 = sphi 0, %s115
      %s118 = sphi 0, %s117
      %s132 = sphi 0, %s118
      %s138 = sphi 0, %s140
      %s141 = sphi 0, %s138
      %s142 = sphi 0, %s141
      %s158 = sphi 0, %s142
    $region4: #{tpu_custom_call.1} parent=1 // loop_header_branch
      %21 = sbr.rel (%p19) target = $region8
    $region5: #{tpu_custom_call.1} parent=1 // loop_body
      %s23 = ssub.s32 %s18, 1
      %s24 = ssub.s32 %s18, 2
      %s25 = sadd.s32 %s18, 1
      %s26 = ssub.s32 %s18, %s25
      %p27 = scmp.eq.s32.totalorder %s26, 0
      %s29 = sadd.s32 %s28, 1
      %s30 = scalar_select %p27, %s28, %s29
      %p33 = pneg %p27
      %p34 = scmp.eq.s32.totalorder %s18, 1
      %p35 = por %p33, %p34
      %p36 = scmp.ne.s32.totalorder %s28, %s31
      %p37 = scmp.eq.s32.totalorder %s18, 0
      %p38 = por %p36, %p37
      %p39 = scmp.ne.s32.totalorder %s28, %s31
      %p40 = scmp.eq.s32.totalorder %s23, 1
      %p41 = por %p39, %p40
      %p42 = scmp.ne.s32.totalorder %s31, %s32
      %p43 = scmp.eq.s32.totalorder %s23, 0
      %p44 = por %p42, %p43
      %p45 = scmp.ne.s32.totalorder %s31, %s32
      %p46 = scmp.eq.s32.totalorder %s24, 1
      %p47 = por %p45, %p46
      %p49 = scmp.ne.s32.totalorder %s32, %s48
      %p50 = scmp.eq.s32.totalorder %s24, 0
      %p51 = por %p49, %p50
      %s53 = sadd.s32 %s52, 1
      %p56 = scmp.eq.s32.totalorder %s18, 1
      %p57 = scmp.ne.s32.totalorder %s52, %s54
      %p58 = scmp.eq.s32.totalorder %s18, 0
      %p59 = por %p57, %p58
      %p60 = scmp.ne.s32.totalorder %s52, %s54
      %p61 = scmp.eq.s32.totalorder %s23, 1
      %p62 = por %p60, %p61
      %p63 = scmp.ne.s32.totalorder %s54, %s55
      %p64 = scmp.eq.s32.totalorder %s23, 0
      %p65 = por %p63, %p64
      %p66 = scmp.ne.s32.totalorder %s54, %s55
      %p67 = scmp.eq.s32.totalorder %s24, 1
      %p68 = por %p66, %p67
      %p70 = scmp.ne.s32.totalorder %s55, %s69
      %p71 = scmp.eq.s32.totalorder %s24, 0
      %p72 = por %p70, %p71
      %s74 = sadd.s32 %s73, 1
      %p77 = scmp.eq.s32.totalorder %s18, 1
      %p78 = scmp.ne.s32.totalorder %s73, %s75
      %p79 = scmp.eq.s32.totalorder %s18, 0
      %p80 = por %p78, %p79
      %p81 = scmp.ne.s32.totalorder %s73, %s75
      %p82 = scmp.eq.s32.totalorder %s23, 1
      %p83 = por %p81, %p82
      %p84 = scmp.ne.s32.totalorder %s75, %s76
      %p85 = scmp.eq.s32.totalorder %s23, 0
      %p86 = por %p84, %p85
      %p87 = scmp.ne.s32.totalorder %s75, %s76
      %p88 = scmp.eq.s32.totalorder %s24, 1
      %p89 = por %p87, %p88
      %p91 = scmp.ne.s32.totalorder %s76, %s90
      %p92 = scmp.eq.s32.totalorder %s24, 0
      %p93 = por %p91, %p92
      %s95 = sadd.s32 %s94, 1
      %p98 = scmp.eq.s32.totalorder %s18, 1
      %p99 = scmp.ne.s32.totalorder %s94, %s96
      %p100 = scmp.eq.s32.totalorder %s18, 0
      %p101 = por %p99, %p100
      %p102 = scmp.ne.s32.totalorder %s94, %s96
      %p103 = scmp.eq.s32.totalorder %s23, 1
      %p104 = por %p102, %p103
      %p105 = scmp.ne.s32.totalorder %s96, %s97
      %p106 = scmp.eq.s32.totalorder %s23, 0
      %p107 = por %p105, %p106
      %p108 = scmp.ne.s32.totalorder %s96, %s97
      %p109 = scmp.eq.s32.totalorder %s24, 1
      %p110 = por %p108, %p109
      %p112 = scmp.ne.s32.totalorder %s97, %s111
      %p113 = scmp.eq.s32.totalorder %s24, 0
      %p114 = por %p112, %p113
      %s116 = sadd.s32 %s115, 1
      %p119 = scmp.eq.s32.totalorder %s18, 1
      %p120 = scmp.ne.s32.totalorder %s115, %s117
      %p121 = scmp.eq.s32.totalorder %s18, 0
      %p122 = por %p120, %p121
      %p123 = scmp.ne.s32.totalorder %s115, %s117
      %p124 = scmp.eq.s32.totalorder %s23, 1
      %p125 = por %p123, %p124
      %p126 = scmp.ne.s32.totalorder %s117, %s118
      %p127 = scmp.eq.s32.totalorder %s23, 0
      %p128 = por %p126, %p127
      %p129 = scmp.ne.s32.totalorder %s117, %s118
      %p130 = scmp.eq.s32.totalorder %s24, 1
      %p131 = por %p129, %p130
      %p133 = scmp.ne.s32.totalorder %s118, %s132
      %p134 = scmp.eq.s32.totalorder %s24, 0
      %p135 = por %p133, %p134
      %s136 = ssub.s32 %s18, %s25
      %p137 = scmp.eq.s32.totalorder %s136, 0
      %s139 = sadd.s32 %s138, 1
      %s140 = scalar_select %p137, %s138, %s139
      %p143 = pneg %p137
      %p144 = scmp.eq.s32.totalorder %s18, 1
      %p145 = por %p143, %p144
      %p146 = scmp.ne.s32.totalorder %s138, %s141
      %p147 = scmp.eq.s32.totalorder %s18, 0
      %p148 = por %p146, %p147
      %p149 = scmp.ne.s32.totalorder %s138, %s141
      %p150 = scmp.eq.s32.totalorder %s23, 1
      %p151 = por %p149, %p150
      %p152 = scmp.ne.s32.totalorder %s141, %s142
      %p153 = scmp.eq.s32.totalorder %s23, 0
      %p154 = por %p152, %p153
      %p155 = scmp.ne.s32.totalorder %s141, %s142
      %p156 = scmp.eq.s32.totalorder %s24, 1
      %p157 = por %p155, %p156
      %p159 = scmp.ne.s32.totalorder %s142, %s158
      %p160 = scmp.eq.s32.totalorder %s24, 0
      %p161 = por %p159, %p160
      %p162 = scmp.le.s32.totalorder 1, %s18
      %p163 = scmp.lt.s32.totalorder %s18, 3
      %p164 = pnand %p162, %p163
      %p165 = pneg %p164
      // Predicated region
      $region9: #{tpu_custom_call.1} parent=5 // pred_check
        _
      $region10: #{tpu_custom_call.1} parent=5 // pred_check_branch
        %167 = sbr.rel (%p164) target = $region12
      $region11: #{tpu_custom_call.1} parent=5 // pred_region
        %s168 = ssub.s32 %s18, 1
        // Predicated region
        $region13: #{tpu_custom_call.1} parent=11 // pred_check
          %p169 = pneg %p65
        $region14: #{tpu_custom_call.1} parent=11 // pred_check_branch
          %171 = sbr.rel (%p169) target = $region16
        $region15: #{tpu_custom_call.1} parent=11 // pred_region
          %s173 = ssub.s32 512, 512
          %174 = vsyncadd [#allocation6], %s173
          %s175 = sshll.u32 [#allocation5], 4
          %s176 = int_to_ptr.vmem [resolvable:$true] %s175
          %181 = dma.hbm_to_vmem [thread:$0]  %s1, 512, %s176, [#allocation6], 128, 128, 8
        $region16: #{tpu_custom_call.1} parent=11 // pred_fallthru
          _
        // Predicated region
        $region17: #{tpu_custom_call.1} parent=11 // pred_check
          %p182 = pneg %p86
        $region18: #{tpu_custom_call.1} parent=11 // pred_check_branch
          %184 = sbr.rel (%p182) target = $region20
        $region19: #{tpu_custom_call.1} parent=11 // pred_region
          _
        $region20: #{tpu_custom_call.1} parent=11 // pred_fallthru
          _
        // Predicated region
        $region21: #{tpu_custom_call.1} parent=11 // pred_check
          %p185 = pneg %p107
        $region22: #{tpu_custom_call.1} parent=11 // pred_check_branch
          %187 = sbr.rel (%p185) target = $region24
        $region23: #{tpu_custom_call.1} parent=11 // pred_region
          %s189 = ssub.s32 512, 512
          %190 = vsyncadd [#allocation6], %s189
          %s191 = sshll.u32 [#allocation7], 4
          %s192 = int_to_ptr.vmem [resolvable:$true] %s191
          %197 = dma.hbm_to_vmem [thread:$0]  %s3, 512, %s192, [#allocation6], 128, 128, 8
        $region24: #{tpu_custom_call.1} parent=11 // pred_fallthru
          _
        // Predicated region
        $region25: #{tpu_custom_call.1} parent=11 // pred_check
          %p198 = pneg %p128
        $region26: #{tpu_custom_call.1} parent=11 // pred_check_branch
          %200 = sbr.rel (%p198) target = $region28
        $region27: #{tpu_custom_call.1} parent=11 // pred_region
          _
        $region28: #{tpu_custom_call.1} parent=11 // pred_fallthru
          _
      $region12: #{tpu_custom_call.1} parent=5 // pred_fallthru
        _
      %p201 = scmp.lt.s32.totalorder %s18, 2
      // Predicated region
      $region29: #{tpu_custom_call.1} parent=5 // pred_check
        %p202 = pneg %p201
      $region30: #{tpu_custom_call.1} parent=5 // pred_check_branch
        %204 = sbr.rel (%p202) target = $region32
      $region31: #{tpu_custom_call.1} parent=5 // pred_region
        // Predicated region
        $region33: #{tpu_custom_call.1} parent=31 // pred_check
          %p205 = pneg %p38
        $region34: #{tpu_custom_call.1} parent=31 // pred_check_branch
          %207 = sbr.rel (%p205) target = $region36
        $region35: #{tpu_custom_call.1} parent=31 // pred_region
          %s208 = sand.u32 %s28, 1
          %s209 = scalar_lea.sflag [#allocation3], %s208
          %s210 = sand.u32 %s28, 1
          %s211 = smul.addr %s210, 8
          %s212 = scalar_lea.vmem [#allocation2], %s211
          %s214 = ssub.s32 128, 128
          %215 = vsyncadd %s209, %s214
          %s216 = smul.addr %s18, 128
          %s217 = scalar_lea.hbm %s0, %s216
          %s219 = sshll.u32 %s212, 4
          %s220 = int_to_ptr.vmem [resolvable:$true] %s219
          %222 = dma.hbm_to_vmem [thread:$0]  %s217, 128, %s220, %s209
        $region36: #{tpu_custom_call.1} parent=31 // pred_fallthru
          _
      $region32: #{tpu_custom_call.1} parent=5 // pred_fallthru
        _
      %p223 = scmp.le.s32.totalorder 1, %s18
      %p224 = scmp.lt.s32.totalorder %s18, 3
      %p225 = pnand %p223, %p224
      %p226 = pneg %p225
      // Predicated region
      $region37: #{tpu_custom_call.1} parent=5 // pred_check
        _
      $region38: #{tpu_custom_call.1} parent=5 // pred_check_branch
        %228 = sbr.rel (%p225) target = $region40
      $region39: #{tpu_custom_call.1} parent=5 // pred_region
        %s229 = ssub.s32 %s18, 1
        %s230 = sand.u32 %s31, 1
        %s231 = scalar_lea.sflag [#allocation3], %s230
        %s232 = sand.u32 %s31, 1
        %s233 = smul.addr %s232, 8
        %s234 = scalar_lea.vmem [#allocation2], %s233
        // Predicated region
        $region41: #{tpu_custom_call.1} parent=39 // pred_check
          %p235 = pneg %p44
        $region42: #{tpu_custom_call.1} parent=39 // pred_check_branch
          %237 = sbr.rel (%p235) target = $region44
        $region43: #{tpu_custom_call.1} parent=39 // pred_region
          %238 = dma.done %s231, 128
        $region44: #{tpu_custom_call.1} parent=39 // pred_fallthru
          _
        // Predicated region
        $region45: #{tpu_custom_call.1} parent=39 // pred_check
          %p239 = pneg %p65
        $region46: #{tpu_custom_call.1} parent=39 // pred_check_branch
          %241 = sbr.rel (%p239) target = $region48
        $region47: #{tpu_custom_call.1} parent=39 // pred_region
          %242 = dma.done [#allocation6], 512
        $region48: #{tpu_custom_call.1} parent=39 // pred_fallthru
          _
        // Predicated region
        $region49: #{tpu_custom_call.1} parent=39 // pred_check
          %p243 = pneg %p107
        $region50: #{tpu_custom_call.1} parent=39 // pred_check_branch
          %245 = sbr.rel (%p243) target = $region52
        $region51: #{tpu_custom_call.1} parent=39 // pred_region
          %246 = dma.done [#allocation6], 512
        $region52: #{tpu_custom_call.1} parent=39 // pred_fallthru
          _
        %s247 = sand.u32 %s31, 1
        %s248 = scalar_lea.sflag [#allocation3], %s247
        %s249 = sand.u32 %s31, 1
        %s250 = smul.addr %s249, 8
        %s251 = scalar_lea.vmem [#allocation2], %s250
        %p252 = pneg %p44
        %p253 = pneg %p41
        %p254 = pneg %p65
        %p255 = pneg %p62
        %p256 = pneg %p86
        %p257 = pneg %p83
        %p258 = pneg %p107
        %p259 = pneg %p104
        %p260 = pneg %p128
        %p261 = pneg %p125
        %p262 = pneg %p154
        %p263 = pneg %p151
        %s264 = sand.u32 %s141, 1
        %s265 = scalar_lea.sflag [#allocation4], %s264
        %s266 = sand.u32 %s141, 1
        %s267 = smul.addr %s266, 8
        %s268 = scalar_lea.vmem [#allocation8], %s267
        %v269 = vld [vmem:[%s234] sm:$0xff]
        %v270 = vld [vmem:[#allocation5] sm:$0xff]
        %v271 = vld [vmem:[#allocation5 + $0x8] sm:$0xff]
        %v272 = vld [vmem:[#allocation5 + $0x10] sm:$0xff]
        %v273 = vld [vmem:[#allocation5 + $0x18] sm:$0xff]
        %v274 = vld [vmem:[%s2] sm:$0x1]
        %v276 = vlaneseq
        %v277 = vshrl.u32 %v276, 7
        %v278 = vsub.s32 0, %v277
        %v279 = vrot.slane %v274, %v278
        %vm281 = vcmask 261120
        %v283 = vsel %vm281, %v269, 0
        %285 = vmatprep.subr.mxu0 0.0
        %286 = vmatpush1.msra.mxu0 %v270
        %287 = vmatprep.subr.mxu0 0.0
        %288 = vmatpush1.msra.mxu0 %v271
        %289 = vmatprep.subr.mxu0 0.0
        %290 = vmatpush1.msra.mxu0 %v272
        %291 = vmatprep.subr.mxu0 0.0
        %292 = vmatpush1.msra.mxu0 %v273
        %293 = vmatprep.subr.mxu0 0.0
        %294 = vmatpush1.msra.mxu0 0.0
        %295 = vmatprep.subr.mxu0 0.0
        %296 = vmatpush1.msra.mxu0 0.0
        %297 = vmatprep.subr.mxu0 0.0
        %298 = vmatpush1.msra.mxu0 0.0
        %299 = vmatprep.subr.mxu0 0.0
        %300 = vmatpush1.msra.mxu0 0.0
        %301 = vmatprep.subr.mxu0 0.0
        %302 = vmatpush1.msra.mxu0 0.0
        %303 = vmatprep.subr.mxu0 0.0
        %304 = vmatpush1.msra.mxu0 0.0
        %305 = vmatprep.subr.mxu0 0.0
        %306 = vmatpush1.msra.mxu0 0.0
        %307 = vmatprep.subr.mxu0 0.0
        %308 = vmatpush1.msra.mxu0 0.0
        %309 = vmatprep.subr.mxu0 0.0
        %310 = vmatpush1.msra.mxu0 0.0
        %311 = vmatprep.subr.mxu0 0.0
        %312 = vmatpush1.msra.mxu0 0.0
        %313 = vmatprep.subr.mxu0 0.0
        %314 = vmatpush1.msra.mxu0 0.0
        %315 = vmatprep.subr.mxu0 0.0
        %316 = vmatpush1.msra.mxu0 0.0
        %317 = vmatprep.subr.mxu0 0.0
        %318 = vmatpush1.msra.mxu0 0.0
        %319 = vmatprep.subr.mxu0 0.0
        %320 = vmatpush1.msra.mxu0 0.0
        %321 = vmatprep.subr.mxu0 0.0
        %322 = vmatpush1.msra.mxu0 0.0
        %323 = vmatprep.subr.mxu0 0.0
        %324 = vmatpush1.msra.mxu0 0.0
        %325 = vmatprep.subr.mxu0 0.0
        %326 = vmatpush1.msra.mxu0 0.0
        %327 = vmatprep.subr.mxu0 0.0
        %328 = vmatpush1.msra.mxu0 0.0
        %329 = vmatprep.subr.mxu0 0.0
        %330 = vmatpush1.msra.mxu0 0.0
        %331 = vmatprep.subr.mxu0 0.0
        %332 = vmatpush1.msra.mxu0 0.0
        %333 = vmatprep.subr.mxu0 0.0
        %334 = vmatpush1.msra.mxu0 0.0
        %335 = vmatprep.subr.mxu0 0.0
        %336 = vmatpush1.msra.mxu0 0.0
        %337 = vmatprep.subr.mxu0 0.0
        %338 = vmatpush1.msra.mxu0 0.0
        %339 = vmatprep.subr.mxu0 0.0
        %340 = vmatpush1.msra.mxu0 0.0
        %341 = vmatprep.subr.mxu0 0.0
        %342 = vmatpush1.msra.mxu0 0.0
        %343 = vmatprep.subr.mxu0 0.0
        %344 = vmatpush1.msra.mxu0 0.0
        %345 = vmatprep.subr.mxu0 0.0
        %346 = vmatpush1.msra.mxu0 0.0
        %347 = vmatprep.subr.mxu0 0.0
        %348 = vmatpush1.msra.mxu0 0.0
        %349 = vmatprep.mubr.f32.mxu0 0.0
        %350 = vmatmul.mubr.f32.gmra.mrb[0].mxu0 %v283
        %v351 = vpop.f32.mrb[0].mxu0
        %v352 = vadd.f32 %v279, %v351
        %v353 = vpop.f32.mrb[0].mxu0
        %354 = vdwg.mxu0
        %356 = vrot.lane.b32.xlu0 %v352, 120
        %v357 = vpop.permute.xlu0 %356
        %358 = vrot.lane.b32.xlu0 %v352, 112
        %v359 = vpop.permute.xlu0 %358
        %360 = vrot.lane.b32.xlu0 %v352, 104
        %v361 = vpop.permute.xlu0 %360
        %362 = vrot.lane.b32.xlu0 %v352, 96
        %v363 = vpop.permute.xlu0 %362
        %vm364 = vcmask 64512
        %v365 = vsel %vm364, %v352, 0
        %v367 = vsel %vm364, %v363, 0
        %369 = vmatprep.subr.mxu0 0.0
        %370 = vmatpush1.xpose.msra.mxu0 %v367
        %371 = vmatprep.subr.mxu0 0.0
        %372 = vmatpush1.xpose.msra.mxu0 0.0
        %373 = vmatprep.subr.mxu0 0.0
        %374 = vmatpush1.xpose.msra.mxu0 0.0
        %375 = vmatprep.subr.mxu0 0.0
        %376 = vmatpush1.xpose.msra.mxu0 0.0
        %377 = vmatprep.subr.mxu0 0.0
        %378 = vmatpush1.xpose.msra.mxu0 0.0
        %379 = vmatprep.subr.mxu0 0.0
        %380 = vmatpush1.xpose.msra.mxu0 0.0
        %381 = vmatprep.subr.mxu0 0.0
        %382 = vmatpush1.xpose.msra.mxu0 0.0
        %383 = vmatprep.subr.mxu0 0.0
        %384 = vmatpush1.xpose.msra.mxu0 0.0
        %385 = vmatprep.subr.mxu0 0.0
        %386 = vmatpush1.xpose.msra.mxu0 0.0
        %387 = vmatprep.subr.mxu0 0.0
        %388 = vmatpush1.xpose.msra.mxu0 0.0
        %389 = vmatprep.subr.mxu0 0.0
        %390 = vmatpush1.xpose.msra.mxu0 0.0
        %391 = vmatprep.subr.mxu0 0.0
        %392 = vmatpush1.xpose.msra.mxu0 0.0
        %393 = vmatprep.subr.mxu0 0.0
        %394 = vmatpush1.xpose.msra.mxu0 0.0
        %395 = vmatprep.subr.mxu0 0.0
        %396 = vmatpush1.xpose.msra.mxu0 0.0
        %397 = vmatprep.subr.mxu0 0.0
        %398 = vmatpush1.xpose.msra.mxu0 0.0
        %399 = vmatprep.subr.mxu0 0.0
        %400 = vmatpush1.xpose.msra.mxu0 0.0
        %401 = vmatprep.subr.mxu0 0.0
        %402 = vmatpush1.xpose.msra.mxu0 0.0
        %403 = vmatprep.subr.mxu0 0.0
        %404 = vmatpush1.xpose.msra.mxu0 0.0
        %405 = vmatprep.subr.mxu0 0.0
        %406 = vmatpush1.xpose.msra.mxu0 0.0
        %407 = vmatprep.subr.mxu0 0.0
        %408 = vmatpush1.xpose.msra.mxu0 0.0
        %409 = vmatprep.subr.mxu0 0.0
        %410 = vmatpush1.xpose.msra.mxu0 0.0
        %411 = vmatprep.subr.mxu0 0.0
        %412 = vmatpush1.xpose.msra.mxu0 0.0
        %413 = vmatprep.subr.mxu0 0.0
        %414 = vmatpush1.xpose.msra.mxu0 0.0
        %415 = vmatprep.subr.mxu0 0.0
        %416 = vmatpush1.xpose.msra.mxu0 0.0
        %417 = vmatprep.subr.mxu0 0.0
        %418 = vmatpush1.xpose.msra.mxu0 0.0
        %419 = vmatprep.subr.mxu0 0.0
        %420 = vmatpush1.xpose.msra.mxu0 0.0
        %421 = vmatprep.subr.mxu0 0.0
        %422 = vmatpush1.xpose.msra.mxu0 0.0
        %423 = vmatprep.subr.mxu0 0.0
        %424 = vmatpush1.xpose.msra.mxu0 0.0
        %425 = vmatprep.subr.mxu0 0.0
        %426 = vmatpush1.xpose.msra.mxu0 0.0
        %427 = vmatprep.subr.mxu0 0.0
        %428 = vmatpush1.xpose.msra.mxu0 0.0
        %429 = vmatprep.subr.mxu0 0.0
        %430 = vmatpush1.xpose.msra.mxu0 0.0
        %431 = vmatprep.subr.mxu0 0.0
        %432 = vmatpush1.xpose.msra.mxu0 0.0
        %433 = vmatprep.mubr.f32.mxu0 0.0
        %434 = vmatmul.mubr.f32.gmra.mrb[0].mxu0 %v365
        %v435 = vpop.f32.mrb[0].mxu0
        %v436 = vadd.f32 0.0, %v435
        %v437 = vpop.f32.mrb[0].mxu0
        %438 = vdwg.mxu0
        %439 = vrot.lane.b32.xlu0 %v357, 96
        %v440 = vpop.permute.xlu0 %439
        %v441 = vsel %vm364, %v357, 0
        %v443 = vsel %vm364, %v440, 0
        %445 = vmatprep.subr.mxu0 0.0
        %446 = vmatpush1.xpose.msra.mxu0 %v443
        %447 = vmatprep.subr.mxu0 0.0
        %448 = vmatpush1.xpose.msra.mxu0 0.0
        %449 = vmatprep.subr.mxu0 0.0
        %450 = vmatpush1.xpose.msra.mxu0 0.0
        %451 = vmatprep.subr.mxu0 0.0
        %452 = vmatpush1.xpose.msra.mxu0 0.0
        %453 = vmatprep.subr.mxu0 0.0
        %454 = vmatpush1.xpose.msra.mxu0 0.0
        %455 = vmatprep.subr.mxu0 0.0
        %456 = vmatpush1.xpose.msra.mxu0 0.0
        %457 = vmatprep.subr.mxu0 0.0
        %458 = vmatpush1.xpose.msra.mxu0 0.0
        %459 = vmatprep.subr.mxu0 0.0
        %460 = vmatpush1.xpose.msra.mxu0 0.0
        %461 = vmatprep.subr.mxu0 0.0
        %462 = vmatpush1.xpose.msra.mxu0 0.0
        %463 = vmatprep.subr.mxu0 0.0
        %464 = vmatpush1.xpose.msra.mxu0 0.0
        %465 = vmatprep.subr.mxu0 0.0
        %466 = vmatpush1.xpose.msra.mxu0 0.0
        %467 = vmatprep.subr.mxu0 0.0
        %468 = vmatpush1.xpose.msra.mxu0 0.0
        %469 = vmatprep.subr.mxu0 0.0
        %470 = vmatpush1.xpose.msra.mxu0 0.0
        %471 = vmatprep.subr.mxu0 0.0
        %472 = vmatpush1.xpose.msra.mxu0 0.0
        %473 = vmatprep.subr.mxu0 0.0
        %474 = vmatpush1.xpose.msra.mxu0 0.0
        %475 = vmatprep.subr.mxu0 0.0
        %476 = vmatpush1.xpose.msra.mxu0 0.0
        %477 = vmatprep.subr.mxu0 0.0
        %478 = vmatpush1.xpose.msra.mxu0 0.0
        %479 = vmatprep.subr.mxu0 0.0
        %480 = vmatpush1.xpose.msra.mxu0 0.0
        %481 = vmatprep.subr.mxu0 0.0
        %482 = vmatpush1.xpose.msra.mxu0 0.0
        %483 = vmatprep.subr.mxu0 0.0
        %484 = vmatpush1.xpose.msra.mxu0 0.0
        %485 = vmatprep.subr.mxu0 0.0
        %486 = vmatpush1.xpose.msra.mxu0 0.0
        %487 = vmatprep.subr.mxu0 0.0
        %488 = vmatpush1.xpose.msra.mxu0 0.0
        %489 = vmatprep.subr.mxu0 0.0
        %490 = vmatpush1.xpose.msra.mxu0 0.0
        %491 = vmatprep.subr.mxu0 0.0
        %492 = vmatpush1.xpose.msra.mxu0 0.0
        %493 = vmatprep.subr.mxu0 0.0
        %494 = vmatpush1.xpose.msra.mxu0 0.0
        %495 = vmatprep.subr.mxu0 0.0
        %496 = vmatpush1.xpose.msra.mxu0 0.0
        %497 = vmatprep.subr.mxu0 0.0
        %498 = vmatpush1.xpose.msra.mxu0 0.0
        %499 = vmatprep.subr.mxu0 0.0
        %500 = vmatpush1.xpose.msra.mxu0 0.0
        %501 = vmatprep.subr.mxu0 0.0
        %502 = vmatpush1.xpose.msra.mxu0 0.0
        %503 = vmatprep.subr.mxu0 0.0
        %504 = vmatpush1.xpose.msra.mxu0 0.0
        %505 = vmatprep.subr.mxu0 0.0
        %506 = vmatpush1.xpose.msra.mxu0 0.0
        %507 = vmatprep.subr.mxu0 0.0
        %508 = vmatpush1.xpose.msra.mxu0 0.0
        %509 = vmatprep.mubr.f32.mxu0 0.0
        %510 = vmatmul.mubr.f32.gmra.mrb[0].mxu0 %v441
        %v511 = vpop.f32.mrb[0].mxu0
        %v512 = vadd.f32 0.0, %v511
        %v513 = vpop.f32.mrb[0].mxu0
        %514 = vdwg.mxu0
        %515 = vrot.lane.b32.xlu0 %v359, 96
        %v516 = vpop.permute.xlu0 %515
        %v517 = vsel %vm364, %v359, 0
        %v519 = vsel %vm364, %v516, 0
        %521 = vmatprep.subr.mxu0 0.0
        %522 = vmatpush1.xpose.msra.mxu0 %v519
        %523 = vmatprep.subr.mxu0 0.0
        %524 = vmatpush1.xpose.msra.mxu0 0.0
        %525 = vmatprep.subr.mxu0 0.0
        %526 = vmatpush1.xpose.msra.mxu0 0.0
        %527 = vmatprep.subr.mxu0 0.0
        %528 = vmatpush1.xpose.msra.mxu0 0.0
        %529 = vmatprep.subr.mxu0 0.0
        %530 = vmatpush1.xpose.msra.mxu0 0.0
        %531 = vmatprep.subr.mxu0 0.0
        %532 = vmatpush1.xpose.msra.mxu0 0.0
        %533 = vmatprep.subr.mxu0 0.0
        %534 = vmatpush1.xpose.msra.mxu0 0.0
        %535 = vmatprep.subr.mxu0 0.0
        %536 = vmatpush1.xpose.msra.mxu0 0.0
        %537 = vmatprep.subr.mxu0 0.0
        %538 = vmatpush1.xpose.msra.mxu0 0.0
        %539 = vmatprep.subr.mxu0 0.0
        %540 = vmatpush1.xpose.msra.mxu0 0.0
        %541 = vmatprep.subr.mxu0 0.0
        %542 = vmatpush1.xpose.msra.mxu0 0.0
        %543 = vmatprep.subr.mxu0 0.0
        %544 = vmatpush1.xpose.msra.mxu0 0.0
        %545 = vmatprep.subr.mxu0 0.0
        %546 = vmatpush1.xpose.msra.mxu0 0.0
        %547 = vmatprep.subr.mxu0 0.0
        %548 = vmatpush1.xpose.msra.mxu0 0.0
        %549 = vmatprep.subr.mxu0 0.0
        %550 = vmatpush1.xpose.msra.mxu0 0.0
        %551 = vmatprep.subr.mxu0 0.0
        %552 = vmatpush1.xpose.msra.mxu0 0.0
        %553 = vmatprep.subr.mxu0 0.0
        %554 = vmatpush1.xpose.msra.mxu0 0.0
        %555 = vmatprep.subr.mxu0 0.0
        %556 = vmatpush1.xpose.msra.mxu0 0.0
        %557 = vmatprep.subr.mxu0 0.0
        %558 = vmatpush1.xpose.msra.mxu0 0.0
        %559 = vmatprep.subr.mxu0 0.0
        %560 = vmatpush1.xpose.msra.mxu0 0.0
        %561 = vmatprep.subr.mxu0 0.0
        %562 = vmatpush1.xpose.msra.mxu0 0.0
        %563 = vmatprep.subr.mxu0 0.0
        %564 = vmatpush1.xpose.msra.mxu0 0.0
        %565 = vmatprep.subr.mxu0 0.0
        %566 = vmatpush1.xpose.msra.mxu0 0.0
        %567 = vmatprep.subr.mxu0 0.0
        %568 = vmatpush1.xpose.msra.mxu0 0.0
        %569 = vmatprep.subr.mxu0 0.0
        %570 = vmatpush1.xpose.msra.mxu0 0.0
        %571 = vmatprep.subr.mxu0 0.0
        %572 = vmatpush1.xpose.msra.mxu0 0.0
        %573 = vmatprep.subr.mxu0 0.0
        %574 = vmatpush1.xpose.msra.mxu0 0.0
        %575 = vmatprep.subr.mxu0 0.0
        %576 = vmatpush1.xpose.msra.mxu0 0.0
        %577 = vmatprep.subr.mxu0 0.0
        %578 = vmatpush1.xpose.msra.mxu0 0.0
        %579 = vmatprep.subr.mxu0 0.0
        %580 = vmatpush1.xpose.msra.mxu0 0.0
        %581 = vmatprep.subr.mxu0 0.0
        %582 = vmatpush1.xpose.msra.mxu0 0.0
        %583 = vmatprep.subr.mxu0 0.0
        %584 = vmatpush1.xpose.msra.mxu0 0.0
        %585 = vmatprep.mubr.f32.mxu0 0.0
        %586 = vmatmul.mubr.f32.gmra.mrb[0].mxu0 %v517
        %v587 = vpop.f32.mrb[0].mxu0
        %v588 = vadd.f32 0.0, %v587
        %v589 = vpop.f32.mrb[0].mxu0
        %590 = vdwg.mxu0
        %591 = vrot.lane.b32.xlu0 %v361, 96
        %v592 = vpop.permute.xlu0 %591
        %v593 = vsel %vm364, %v361, 0
        %v595 = vsel %vm364, %v592, 0
        %597 = vmatprep.subr.mxu0 0.0
        %598 = vmatpush1.xpose.msra.mxu0 %v595
        %599 = vmatprep.subr.mxu0 0.0
        %600 = vmatpush1.xpose.msra.mxu0 0.0
        %601 = vmatprep.subr.mxu0 0.0
        %602 = vmatpush1.xpose.msra.mxu0 0.0
        %603 = vmatprep.subr.mxu0 0.0
        %604 = vmatpush1.xpose.msra.mxu0 0.0
        %605 = vmatprep.subr.mxu0 0.0
        %606 = vmatpush1.xpose.msra.mxu0 0.0
        %607 = vmatprep.subr.mxu0 0.0
        %608 = vmatpush1.xpose.msra.mxu0 0.0
        %609 = vmatprep.subr.mxu0 0.0
        %610 = vmatpush1.xpose.msra.mxu0 0.0
        %611 = vmatprep.subr.mxu0 0.0
        %612 = vmatpush1.xpose.msra.mxu0 0.0
        %613 = vmatprep.subr.mxu0 0.0
        %614 = vmatpush1.xpose.msra.mxu0 0.0
        %615 = vmatprep.subr.mxu0 0.0
        %616 = vmatpush1.xpose.msra.mxu0 0.0
        %617 = vmatprep.subr.mxu0 0.0
        %618 = vmatpush1.xpose.msra.mxu0 0.0
        %619 = vmatprep.subr.mxu0 0.0
        %620 = vmatpush1.xpose.msra.mxu0 0.0
        %621 = vmatprep.subr.mxu0 0.0
        %622 = vmatpush1.xpose.msra.mxu0 0.0
        %623 = vmatprep.subr.mxu0 0.0
        %624 = vmatpush1.xpose.msra.mxu0 0.0
        %625 = vmatprep.subr.mxu0 0.0
        %626 = vmatpush1.xpose.msra.mxu0 0.0
        %627 = vmatprep.subr.mxu0 0.0
        %628 = vmatpush1.xpose.msra.mxu0 0.0
        %629 = vmatprep.subr.mxu0 0.0
        %630 = vmatpush1.xpose.msra.mxu0 0.0
        %631 = vmatprep.subr.mxu0 0.0
        %632 = vmatpush1.xpose.msra.mxu0 0.0
        %633 = vmatprep.subr.mxu0 0.0
        %634 = vmatpush1.xpose.msra.mxu0 0.0
        %635 = vmatprep.subr.mxu0 0.0
        %636 = vmatpush1.xpose.msra.mxu0 0.0
        %637 = vmatprep.subr.mxu0 0.0
        %638 = vmatpush1.xpose.msra.mxu0 0.0
        %639 = vmatprep.subr.mxu0 0.0
        %640 = vmatpush1.xpose.msra.mxu0 0.0
        %641 = vmatprep.subr.mxu0 0.0
        %642 = vmatpush1.xpose.msra.mxu0 0.0
        %643 = vmatprep.subr.mxu0 0.0
        %644 = vmatpush1.xpose.msra.mxu0 0.0
        %645 = vmatprep.subr.mxu0 0.0
        %646 = vmatpush1.xpose.msra.mxu0 0.0
        %647 = vmatprep.subr.mxu0 0.0
        %648 = vmatpush1.xpose.msra.mxu0 0.0
        %649 = vmatprep.subr.mxu0 0.0
        %650 = vmatpush1.xpose.msra.mxu0 0.0
        %651 = vmatprep.subr.mxu0 0.0
        %652 = vmatpush1.xpose.msra.mxu0 0.0
        %653 = vmatprep.subr.mxu0 0.0
        %654 = vmatpush1.xpose.msra.mxu0 0.0
        %655 = vmatprep.subr.mxu0 0.0
        %656 = vmatpush1.xpose.msra.mxu0 0.0
        %657 = vmatprep.subr.mxu0 0.0
        %658 = vmatpush1.xpose.msra.mxu0 0.0
        %659 = vmatprep.subr.mxu0 0.0
        %660 = vmatpush1.xpose.msra.mxu0 0.0
        %661 = vmatprep.mubr.f32.mxu0 0.0
        %662 = vmatmul.mubr.f32.gmra.mrb[0].mxu0 %v593
        %v663 = vpop.f32.mrb[0].mxu0
        %v664 = vadd.f32 0.0, %v663
        %v665 = vpop.f32.mrb[0].mxu0
        %666 = vdwg.mxu0
        %v667 = vsel %vm364, %v436, -inf
        %668 = vmax.xlane.f32.xlu0 %v667
        %v669 = vpop.xlane.xlu0 %668
        %v670 = vsel %vm364, %v512, -inf
        %671 = vmax.xlane.f32.xlu0 %v670
        %v672 = vpop.xlane.xlu0 %671
        %v673 = vsel %vm364, %v588, -inf
        %674 = vmax.xlane.f32.xlu0 %v673
        %v675 = vpop.xlane.xlu0 %674
        %v676 = vsel %vm364, %v664, -inf
        %677 = vmax.xlane.f32.xlu0 %v676
        %v678 = vpop.xlane.xlu0 %677
        %v679 = vsub.f32 %v436, %v669
        %v680 = vsub.f32 %v512, %v672
        %v681 = vsub.f32 %v588, %v675
        %v682 = vsub.f32 %v664, %v678
        %v683 = vmul.f32 %v679, 1.442695
        %v684 = vpow.pop %v683
        %v685 = vmul.f32 %v680, 1.442695
        %v686 = vpow.pop %v685
        %v687 = vmul.f32 %v681, 1.442695
        %v688 = vpow.pop %v687
        %v689 = vmul.f32 %v682, 1.442695
        %v690 = vpow.pop %v689
        %v691 = vsel %vm364, %v684, 0.0
        %692 = vadd.xlane.f32.xlu0 %v691
        %v693 = vpop.xlane.xlu0 %692
        %v694 = vsel %vm364, %v686, 0.0
        %695 = vadd.xlane.f32.xlu0 %v694
        %v696 = vpop.xlane.xlu0 %695
        %v697 = vsel %vm364, %v688, 0.0
        %698 = vadd.xlane.f32.xlu0 %v697
        %v699 = vpop.xlane.xlu0 %698
        %v700 = vsel %vm364, %v690, 0.0
        %701 = vadd.xlane.f32.xlu0 %v700
        %v702 = vpop.xlane.xlu0 %701
        %v703 = vrcp.pop %v693
        %v704 = vrcp.pop %v696
        %v705 = vrcp.pop %v699
        %v706 = vrcp.pop %v702
        %v707 = vmul.f32 %v684, %v703
        %v708 = vmul.f32 %v686, %v704
        %v709 = vmul.f32 %v688, %v705
        %v710 = vmul.f32 %v690, %v706
        %711 = vrot.lane.b32.xlu0 %v352, 64
        %v712 = vpop.permute.xlu0 %711
        %v715 = vsel %vm364, %v707, 0
        %717 = vmatprep.subr.mxu0 0.0
        %718 = vmatpush1.msra.mxu0 %v712
        %719 = vmatprep.subr.mxu0 0.0
        %720 = vmatpush1.msra.mxu0 0.0
        %721 = vmatprep.subr.mxu0 0.0
        %722 = vmatpush1.msra.mxu0 0.0
        %723 = vmatprep.subr.mxu0 0.0
        %724 = vmatpush1.msra.mxu0 0.0
        %725 = vmatprep.subr.mxu0 0.0
        %726 = vmatpush1.msra.mxu0 0.0
        %727 = vmatprep.subr.mxu0 0.0
        %728 = vmatpush1.msra.mxu0 0.0
        %729 = vmatprep.subr.mxu0 0.0
        %730 = vmatpush1.msra.mxu0 0.0
        %731 = vmatprep.subr.mxu0 0.0
        %732 = vmatpush1.msra.mxu0 0.0
        %733 = vmatprep.subr.mxu0 0.0
        %734 = vmatpush1.msra.mxu0 0.0
        %735 = vmatprep.subr.mxu0 0.0
        %736 = vmatpush1.msra.mxu0 0.0
        %737 = vmatprep.subr.mxu0 0.0
        %738 = vmatpush1.msra.mxu0 0.0
        %739 = vmatprep.subr.mxu0 0.0
        %740 = vmatpush1.msra.mxu0 0.0
        %741 = vmatprep.subr.mxu0 0.0
        %742 = vmatpush1.msra.mxu0 0.0
        %743 = vmatprep.subr.mxu0 0.0
        %744 = vmatpush1.msra.mxu0 0.0
        %745 = vmatprep.subr.mxu0 0.0
        %746 = vmatpush1.msra.mxu0 0.0
        %747 = vmatprep.subr.mxu0 0.0
        %748 = vmatpush1.msra.mxu0 0.0
        %749 = vmatprep.subr.mxu0 0.0
        %750 = vmatpush1.msra.mxu0 0.0
        %751 = vmatprep.subr.mxu0 0.0
        %752 = vmatpush1.msra.mxu0 0.0
        %753 = vmatprep.subr.mxu0 0.0
        %754 = vmatpush1.msra.mxu0 0.0
        %755 = vmatprep.subr.mxu0 0.0
        %756 = vmatpush1.msra.mxu0 0.0
        %757 = vmatprep.subr.mxu0 0.0
        %758 = vmatpush1.msra.mxu0 0.0
        %759 = vmatprep.subr.mxu0 0.0
        %760 = vmatpush1.msra.mxu0 0.0
        %761 = vmatprep.subr.mxu0 0.0
        %762 = vmatpush1.msra.mxu0 0.0
        %763 = vmatprep.subr.mxu0 0.0
        %764 = vmatpush1.msra.mxu0 0.0
        %765 = vmatprep.subr.mxu0 0.0
        %766 = vmatpush1.msra.mxu0 0.0
        %767 = vmatprep.subr.mxu0 0.0
        %768 = vmatpush1.msra.mxu0 0.0
        %769 = vmatprep.subr.mxu0 0.0
        %770 = vmatpush1.msra.mxu0 0.0
        %771 = vmatprep.subr.mxu0 0.0
        %772 = vmatpush1.msra.mxu0 0.0
        %773 = vmatprep.subr.mxu0 0.0
        %774 = vmatpush1.msra.mxu0 0.0
        %775 = vmatprep.subr.mxu0 0.0
        %776 = vmatpush1.msra.mxu0 0.0
        %777 = vmatprep.subr.mxu0 0.0
        %778 = vmatpush1.msra.mxu0 0.0
        %779 = vmatprep.subr.mxu0 0.0
        %780 = vmatpush1.msra.mxu0 0.0
        %781 = vmatprep.mubr.f32.mxu0 0.0
        %782 = vmatmul.mubr.f32.gmra.mrb[0].mxu0 %v715
        %v783 = vpop.f32.mrb[0].mxu0
        %v784 = vadd.f32 0.0, %v783
        %v785 = vpop.f32.mrb[0].mxu0
        %786 = vdwg.mxu0
        %787 = vrot.lane.b32.xlu0 %v357, 64
        %v788 = vpop.permute.xlu0 %787
        %v791 = vsel %vm364, %v708, 0
        %793 = vmatprep.subr.mxu0 0.0
        %794 = vmatpush1.msra.mxu0 %v788
        %795 = vmatprep.subr.mxu0 0.0
        %796 = vmatpush1.msra.mxu0 0.0
        %797 = vmatprep.subr.mxu0 0.0
        %798 = vmatpush1.msra.mxu0 0.0
        %799 = vmatprep.subr.mxu0 0.0
        %800 = vmatpush1.msra.mxu0 0.0
        %801 = vmatprep.subr.mxu0 0.0
        %802 = vmatpush1.msra.mxu0 0.0
        %803 = vmatprep.subr.mxu0 0.0
        %804 = vmatpush1.msra.mxu0 0.0
        %805 = vmatprep.subr.mxu0 0.0
        %806 = vmatpush1.msra.mxu0 0.0
        %807 = vmatprep.subr.mxu0 0.0
        %808 = vmatpush1.msra.mxu0 0.0
        %809 = vmatprep.subr.mxu0 0.0
        %810 = vmatpush1.msra.mxu0 0.0
        %811 = vmatprep.subr.mxu0 0.0
        %812 = vmatpush1.msra.mxu0 0.0
        %813 = vmatprep.subr.mxu0 0.0
        %814 = vmatpush1.msra.mxu0 0.0
        %815 = vmatprep.subr.mxu0 0.0
        %816 = vmatpush1.msra.mxu0 0.0
        %817 = vmatprep.subr.mxu0 0.0
        %818 = vmatpush1.msra.mxu0 0.0
        %819 = vmatprep.subr.mxu0 0.0
        %820 = vmatpush1.msra.mxu0 0.0
        %821 = vmatprep.subr.mxu0 0.0
        %822 = vmatpush1.msra.mxu0 0.0
        %823 = vmatprep.subr.mxu0 0.0
        %824 = vmatpush1.msra.mxu0 0.0
        %825 = vmatprep.subr.mxu0 0.0
        %826 = vmatpush1.msra.mxu0 0.0
        %827 = vmatprep.subr.mxu0 0.0
        %828 = vmatpush1.msra.mxu0 0.0
        %829 = vmatprep.subr.mxu0 0.0
        %830 = vmatpush1.msra.mxu0 0.0
        %831 = vmatprep.subr.mxu0 0.0
        %832 = vmatpush1.msra.mxu0 0.0
        %833 = vmatprep.subr.mxu0 0.0
        %834 = vmatpush1.msra.mxu0 0.0
        %835 = vmatprep.subr.mxu0 0.0
        %836 = vmatpush1.msra.mxu0 0.0
        %837 = vmatprep.subr.mxu0 0.0
        %838 = vmatpush1.msra.mxu0 0.0
        %839 = vmatprep.subr.mxu0 0.0
        %840 = vmatpush1.msra.mxu0 0.0
        %841 = vmatprep.subr.mxu0 0.0
        %842 = vmatpush1.msra.mxu0 0.0
        %843 = vmatprep.subr.mxu0 0.0
        %844 = vmatpush1.msra.mxu0 0.0
        %845 = vmatprep.subr.mxu0 0.0
        %846 = vmatpush1.msra.mxu0 0.0
        %847 = vmatprep.subr.mxu0 0.0
        %848 = vmatpush1.msra.mxu0 0.0
        %849 = vmatprep.subr.mxu0 0.0
        %850 = vmatpush1.msra.mxu0 0.0
        %851 = vmatprep.subr.mxu0 0.0
        %852 = vmatpush1.msra.mxu0 0.0
        %853 = vmatprep.subr.mxu0 0.0
        %854 = vmatpush1.msra.mxu0 0.0
        %855 = vmatprep.subr.mxu0 0.0
        %856 = vmatpush1.msra.mxu0 0.0
        %857 = vmatprep.mubr.f32.mxu0 0.0
        %858 = vmatmul.mubr.f32.gmra.mrb[0].mxu0 %v791
        %v859 = vpop.f32.mrb[0].mxu0
        %v860 = vadd.f32 0.0, %v859
        %v861 = vpop.f32.mrb[0].mxu0
        %862 = vdwg.mxu0
        %863 = vrot.lane.b32.xlu0 %v359, 64
        %v864 = vpop.permute.xlu0 %863
        %v867 = vsel %vm364, %v709, 0
        %869 = vmatprep.subr.mxu0 0.0
        %870 = vmatpush1.msra.mxu0 %v864
        %871 = vmatprep.subr.mxu0 0.0
        %872 = vmatpush1.msra.mxu0 0.0
        %873 = vmatprep.subr.mxu0 0.0
        %874 = vmatpush1.msra.mxu0 0.0
        %875 = vmatprep.subr.mxu0 0.0
        %876 = vmatpush1.msra.mxu0 0.0
        %877 = vmatprep.subr.mxu0 0.0
        %878 = vmatpush1.msra.mxu0 0.0
        %879 = vmatprep.subr.mxu0 0.0
        %880 = vmatpush1.msra.mxu0 0.0
        %881 = vmatprep.subr.mxu0 0.0
        %882 = vmatpush1.msra.mxu0 0.0
        %883 = vmatprep.subr.mxu0 0.0
        %884 = vmatpush1.msra.mxu0 0.0
        %885 = vmatprep.subr.mxu0 0.0
        %886 = vmatpush1.msra.mxu0 0.0
        %887 = vmatprep.subr.mxu0 0.0
        %888 = vmatpush1.msra.mxu0 0.0
        %889 = vmatprep.subr.mxu0 0.0
        %890 = vmatpush1.msra.mxu0 0.0
        %891 = vmatprep.subr.mxu0 0.0
        %892 = vmatpush1.msra.mxu0 0.0
        %893 = vmatprep.subr.mxu0 0.0
        %894 = vmatpush1.msra.mxu0 0.0
        %895 = vmatprep.subr.mxu0 0.0
        %896 = vmatpush1.msra.mxu0 0.0
        %897 = vmatprep.subr.mxu0 0.0
        %898 = vmatpush1.msra.mxu0 0.0
        %899 = vmatprep.subr.mxu0 0.0
        %900 = vmatpush1.msra.mxu0 0.0
        %901 = vmatprep.subr.mxu0 0.0
        %902 = vmatpush1.msra.mxu0 0.0
        %903 = vmatprep.subr.mxu0 0.0
        %904 = vmatpush1.msra.mxu0 0.0
        %905 = vmatprep.subr.mxu0 0.0
        %906 = vmatpush1.msra.mxu0 0.0
        %907 = vmatprep.subr.mxu0 0.0
        %908 = vmatpush1.msra.mxu0 0.0
        %909 = vmatprep.subr.mxu0 0.0
        %910 = vmatpush1.msra.mxu0 0.0
        %911 = vmatprep.subr.mxu0 0.0
        %912 = vmatpush1.msra.mxu0 0.0
        %913 = vmatprep.subr.mxu0 0.0
        %914 = vmatpush1.msra.mxu0 0.0
        %915 = vmatprep.subr.mxu0 0.0
        %916 = vmatpush1.msra.mxu0 0.0
        %917 = vmatprep.subr.mxu0 0.0
        %918 = vmatpush1.msra.mxu0 0.0
        %919 = vmatprep.subr.mxu0 0.0
        %920 = vmatpush1.msra.mxu0 0.0
        %921 = vmatprep.subr.mxu0 0.0
        %922 = vmatpush1.msra.mxu0 0.0
        %923 = vmatprep.subr.mxu0 0.0
        %924 = vmatpush1.msra.mxu0 0.0
        %925 = vmatprep.subr.mxu0 0.0
        %926 = vmatpush1.msra.mxu0 0.0
        %927 = vmatprep.subr.mxu0 0.0
        %928 = vmatpush1.msra.mxu0 0.0
        %929 = vmatprep.subr.mxu0 0.0
        %930 = vmatpush1.msra.mxu0 0.0
        %931 = vmatprep.subr.mxu0 0.0
        %932 = vmatpush1.msra.mxu0 0.0
        %933 = vmatprep.mubr.f32.mxu0 0.0
        %934 = vmatmul.mubr.f32.gmra.mrb[0].mxu0 %v867
        %v935 = vpop.f32.mrb[0].mxu0
        %v936 = vadd.f32 0.0, %v935
        %v937 = vpop.f32.mrb[0].mxu0
        %938 = vdwg.mxu0
        %939 = vrot.lane.b32.xlu0 %v361, 64
        %v940 = vpop.permute.xlu0 %939
        %v943 = vsel %vm364, %v710, 0
        %945 = vmatprep.subr.mxu0 0.0
        %946 = vmatpush1.msra.mxu0 %v940
        %947 = vmatprep.subr.mxu0 0.0
        %948 = vmatpush1.msra.mxu0 0.0
        %949 = vmatprep.subr.mxu0 0.0
        %950 = vmatpush1.msra.mxu0 0.0
        %951 = vmatprep.subr.mxu0 0.0
        %952 = vmatpush1.msra.mxu0 0.0
        %953 = vmatprep.subr.mxu0 0.0
        %954 = vmatpush1.msra.mxu0 0.0
        %955 = vmatprep.subr.mxu0 0.0
        %956 = vmatpush1.msra.mxu0 0.0
        %957 = vmatprep.subr.mxu0 0.0
        %958 = vmatpush1.msra.mxu0 0.0
        %959 = vmatprep.subr.mxu0 0.0
        %960 = vmatpush1.msra.mxu0 0.0
        %961 = vmatprep.subr.mxu0 0.0
        %962 = vmatpush1.msra.mxu0 0.0
        %963 = vmatprep.subr.mxu0 0.0
        %964 = vmatpush1.msra.mxu0 0.0
        %965 = vmatprep.subr.mxu0 0.0
        %966 = vmatpush1.msra.mxu0 0.0
        %967 = vmatprep.subr.mxu0 0.0
        %968 = vmatpush1.msra.mxu0 0.0
        %969 = vmatprep.subr.mxu0 0.0
        %970 = vmatpush1.msra.mxu0 0.0
        %971 = vmatprep.subr.mxu0 0.0
        %972 = vmatpush1.msra.mxu0 0.0
        %973 = vmatprep.subr.mxu0 0.0
        %974 = vmatpush1.msra.mxu0 0.0
        %975 = vmatprep.subr.mxu0 0.0
        %976 = vmatpush1.msra.mxu0 0.0
        %977 = vmatprep.subr.mxu0 0.0
        %978 = vmatpush1.msra.mxu0 0.0
        %979 = vmatprep.subr.mxu0 0.0
        %980 = vmatpush1.msra.mxu0 0.0
        %981 = vmatprep.subr.mxu0 0.0
        %982 = vmatpush1.msra.mxu0 0.0
        %983 = vmatprep.subr.mxu0 0.0
        %984 = vmatpush1.msra.mxu0 0.0
        %985 = vmatprep.subr.mxu0 0.0
        %986 = vmatpush1.msra.mxu0 0.0
        %987 = vmatprep.subr.mxu0 0.0
        %988 = vmatpush1.msra.mxu0 0.0
        %989 = vmatprep.subr.mxu0 0.0
        %990 = vmatpush1.msra.mxu0 0.0
        %991 = vmatprep.subr.mxu0 0.0
        %992 = vmatpush1.msra.mxu0 0.0
        %993 = vmatprep.subr.mxu0 0.0
        %994 = vmatpush1.msra.mxu0 0.0
        %995 = vmatprep.subr.mxu0 0.0
        %996 = vmatpush1.msra.mxu0 0.0
        %997 = vmatprep.subr.mxu0 0.0
        %998 = vmatpush1.msra.mxu0 0.0
        %999 = vmatprep.subr.mxu0 0.0
        %1000 = vmatpush1.msra.mxu0 0.0
        %1001 = vmatprep.subr.mxu0 0.0
        %1002 = vmatpush1.msra.mxu0 0.0
        %1003 = vmatprep.subr.mxu0 0.0
        %1004 = vmatpush1.msra.mxu0 0.0
        %1005 = vmatprep.subr.mxu0 0.0
        %1006 = vmatpush1.msra.mxu0 0.0
        %1007 = vmatprep.subr.mxu0 0.0
        %1008 = vmatpush1.msra.mxu0 0.0
        %1009 = vmatprep.mubr.f32.mxu0 0.0
        %1010 = vmatmul.mubr.f32.gmra.mrb[0].mxu0 %v943
        %v1011 = vpop.f32.mrb[0].mxu0
        %v1012 = vadd.f32 0.0, %v1011
        %v1013 = vpop.f32.mrb[0].mxu0
        %1014 = vdwg.mxu0
        %v1015 = vld [vmem:[#allocation7] sm:$0xff]
        %v1016 = vld [vmem:[#allocation7 + $0x8] sm:$0xff]
        %v1017 = vld [vmem:[#allocation7 + $0x10] sm:$0xff]
        %v1018 = vld [vmem:[#allocation7 + $0x18] sm:$0xff]
        %v1020 = vsel %vm364, %v784, 0
        %1022 = vmatprep.subr.mxu0 0.0
        %1023 = vmatpush1.msra.mxu0 %v1015
        %1024 = vmatprep.subr.mxu0 0.0
        %1025 = vmatpush1.msra.mxu0 0.0
        %1026 = vmatprep.subr.mxu0 0.0
        %1027 = vmatpush1.msra.mxu0 0.0
        %1028 = vmatprep.subr.mxu0 0.0
        %1029 = vmatpush1.msra.mxu0 0.0
        %1030 = vmatprep.subr.mxu0 0.0
        %1031 = vmatpush1.msra.mxu0 0.0
        %1032 = vmatprep.subr.mxu0 0.0
        %1033 = vmatpush1.msra.mxu0 0.0
        %1034 = vmatprep.subr.mxu0 0.0
        %1035 = vmatpush1.msra.mxu0 0.0
        %1036 = vmatprep.subr.mxu0 0.0
        %1037 = vmatpush1.msra.mxu0 0.0
        %1038 = vmatprep.subr.mxu0 0.0
        %1039 = vmatpush1.msra.mxu0 0.0
        %1040 = vmatprep.subr.mxu0 0.0
        %1041 = vmatpush1.msra.mxu0 0.0
        %1042 = vmatprep.subr.mxu0 0.0
        %1043 = vmatpush1.msra.mxu0 0.0
        %1044 = vmatprep.subr.mxu0 0.0
        %1045 = vmatpush1.msra.mxu0 0.0
        %1046 = vmatprep.subr.mxu0 0.0
        %1047 = vmatpush1.msra.mxu0 0.0
        %1048 = vmatprep.subr.mxu0 0.0
        %1049 = vmatpush1.msra.mxu0 0.0
        %1050 = vmatprep.subr.mxu0 0.0
        %1051 = vmatpush1.msra.mxu0 0.0
        %1052 = vmatprep.subr.mxu0 0.0
        %1053 = vmatpush1.msra.mxu0 0.0
        %1054 = vmatprep.subr.mxu0 0.0
        %1055 = vmatpush1.msra.mxu0 0.0
        %1056 = vmatprep.subr.mxu0 0.0
        %1057 = vmatpush1.msra.mxu0 0.0
        %1058 = vmatprep.subr.mxu0 0.0
        %1059 = vmatpush1.msra.mxu0 0.0
        %1060 = vmatprep.subr.mxu0 0.0
        %1061 = vmatpush1.msra.mxu0 0.0
        %1062 = vmatprep.subr.mxu0 0.0
        %1063 = vmatpush1.msra.mxu0 0.0
        %1064 = vmatprep.subr.mxu0 0.0
        %1065 = vmatpush1.msra.mxu0 0.0
        %1066 = vmatprep.subr.mxu0 0.0
        %1067 = vmatpush1.msra.mxu0 0.0
        %1068 = vmatprep.subr.mxu0 0.0
        %1069 = vmatpush1.msra.mxu0 0.0
        %1070 = vmatprep.subr.mxu0 0.0
        %1071 = vmatpush1.msra.mxu0 0.0
        %1072 = vmatprep.subr.mxu0 0.0
        %1073 = vmatpush1.msra.mxu0 0.0
        %1074 = vmatprep.subr.mxu0 0.0
        %1075 = vmatpush1.msra.mxu0 0.0
        %1076 = vmatprep.subr.mxu0 0.0
        %1077 = vmatpush1.msra.mxu0 0.0
        %1078 = vmatprep.subr.mxu0 0.0
        %1079 = vmatpush1.msra.mxu0 0.0
        %1080 = vmatprep.subr.mxu0 0.0
        %1081 = vmatpush1.msra.mxu0 0.0
        %1082 = vmatprep.subr.mxu0 0.0
        %1083 = vmatpush1.msra.mxu0 0.0
        %1084 = vmatprep.subr.mxu0 0.0
        %1085 = vmatpush1.msra.mxu0 0.0
        %1086 = vmatprep.mubr.f32.mxu0 0.0
        %1087 = vmatmul.mubr.f32.gmra.mrb[0].mxu0 %v1020
        %v1088 = vpop.f32.mrb[0].mxu0
        %v1089 = vadd.f32 0.0, %v1088
        %v1090 = vpop.f32.mrb[0].mxu0
        %1091 = vdwg.mxu0
        %v1093 = vsel %vm364, %v860, 0
        %1095 = vmatprep.subr.mxu0 0.0
        %1096 = vmatpush1.msra.mxu0 %v1016
        %1097 = vmatprep.subr.mxu0 0.0
        %1098 = vmatpush1.msra.mxu0 0.0
        %1099 = vmatprep.subr.mxu0 0.0
        %1100 = vmatpush1.msra.mxu0 0.0
        %1101 = vmatprep.subr.mxu0 0.0
        %1102 = vmatpush1.msra.mxu0 0.0
        %1103 = vmatprep.subr.mxu0 0.0
        %1104 = vmatpush1.msra.mxu0 0.0
        %1105 = vmatprep.subr.mxu0 0.0
        %1106 = vmatpush1.msra.mxu0 0.0
        %1107 = vmatprep.subr.mxu0 0.0
        %1108 = vmatpush1.msra.mxu0 0.0
        %1109 = vmatprep.subr.mxu0 0.0
        %1110 = vmatpush1.msra.mxu0 0.0
        %1111 = vmatprep.subr.mxu0 0.0
        %1112 = vmatpush1.msra.mxu0 0.0
        %1113 = vmatprep.subr.mxu0 0.0
        %1114 = vmatpush1.msra.mxu0 0.0
        %1115 = vmatprep.subr.mxu0 0.0
        %1116 = vmatpush1.msra.mxu0 0.0
        %1117 = vmatprep.subr.mxu0 0.0
        %1118 = vmatpush1.msra.mxu0 0.0
        %1119 = vmatprep.subr.mxu0 0.0
        %1120 = vmatpush1.msra.mxu0 0.0
        %1121 = vmatprep.subr.mxu0 0.0
        %1122 = vmatpush1.msra.mxu0 0.0
        %1123 = vmatprep.subr.mxu0 0.0
        %1124 = vmatpush1.msra.mxu0 0.0
        %1125 = vmatprep.subr.mxu0 0.0
        %1126 = vmatpush1.msra.mxu0 0.0
        %1127 = vmatprep.subr.mxu0 0.0
        %1128 = vmatpush1.msra.mxu0 0.0
        %1129 = vmatprep.subr.mxu0 0.0
        %1130 = vmatpush1.msra.mxu0 0.0
        %1131 = vmatprep.subr.mxu0 0.0
        %1132 = vmatpush1.msra.mxu0 0.0
        %1133 = vmatprep.subr.mxu0 0.0
        %1134 = vmatpush1.msra.mxu0 0.0
        %1135 = vmatprep.subr.mxu0 0.0
        %1136 = vmatpush1.msra.mxu0 0.0
        %1137 = vmatprep.subr.mxu0 0.0
        %1138 = vmatpush1.msra.mxu0 0.0
        %1139 = vmatprep.subr.mxu0 0.0
        %1140 = vmatpush1.msra.mxu0 0.0
        %1141 = vmatprep.subr.mxu0 0.0
        %1142 = vmatpush1.msra.mxu0 0.0
        %1143 = vmatprep.subr.mxu0 0.0
        %1144 = vmatpush1.msra.mxu0 0.0
        %1145 = vmatprep.subr.mxu0 0.0
        %1146 = vmatpush1.msra.mxu0 0.0
        %1147 = vmatprep.subr.mxu0 0.0
        %1148 = vmatpush1.msra.mxu0 0.0
        %1149 = vmatprep.subr.mxu0 0.0
        %1150 = vmatpush1.msra.mxu0 0.0
        %1151 = vmatprep.subr.mxu0 0.0
        %1152 = vmatpush1.msra.mxu0 0.0
        %1153 = vmatprep.subr.mxu0 0.0
        %1154 = vmatpush1.msra.mxu0 0.0
        %1155 = vmatprep.subr.mxu0 0.0
        %1156 = vmatpush1.msra.mxu0 0.0
        %1157 = vmatprep.subr.mxu0 0.0
        %1158 = vmatpush1.msra.mxu0 0.0
        %1159 = vmatprep.mubr.f32.mxu0 0.0
        %1160 = vmatmul.mubr.f32.gmra.mrb[0].mxu0 %v1093
        %v1161 = vpop.f32.mrb[0].mxu0
        %v1162 = vadd.f32 0.0, %v1161
        %v1163 = vpop.f32.mrb[0].mxu0
        %1164 = vdwg.mxu0
        %v1166 = vsel %vm364, %v936, 0
        %1168 = vmatprep.subr.mxu0 0.0
        %1169 = vmatpush1.msra.mxu0 %v1017
        %1170 = vmatprep.subr.mxu0 0.0
        %1171 = vmatpush1.msra.mxu0 0.0
        %1172 = vmatprep.subr.mxu0 0.0
        %1173 = vmatpush1.msra.mxu0 0.0
        %1174 = vmatprep.subr.mxu0 0.0
        %1175 = vmatpush1.msra.mxu0 0.0
        %1176 = vmatprep.subr.mxu0 0.0
        %1177 = vmatpush1.msra.mxu0 0.0
        %1178 = vmatprep.subr.mxu0 0.0
        %1179 = vmatpush1.msra.mxu0 0.0
        %1180 = vmatprep.subr.mxu0 0.0
        %1181 = vmatpush1.msra.mxu0 0.0
        %1182 = vmatprep.subr.mxu0 0.0
        %1183 = vmatpush1.msra.mxu0 0.0
        %1184 = vmatprep.subr.mxu0 0.0
        %1185 = vmatpush1.msra.mxu0 0.0
        %1186 = vmatprep.subr.mxu0 0.0
        %1187 = vmatpush1.msra.mxu0 0.0
        %1188 = vmatprep.subr.mxu0 0.0
        %1189 = vmatpush1.msra.mxu0 0.0
        %1190 = vmatprep.subr.mxu0 0.0
        %1191 = vmatpush1.msra.mxu0 0.0
        %1192 = vmatprep.subr.mxu0 0.0
        %1193 = vmatpush1.msra.mxu0 0.0
        %1194 = vmatprep.subr.mxu0 0.0
        %1195 = vmatpush1.msra.mxu0 0.0
        %1196 = vmatprep.subr.mxu0 0.0
        %1197 = vmatpush1.msra.mxu0 0.0
        %1198 = vmatprep.subr.mxu0 0.0
        %1199 = vmatpush1.msra.mxu0 0.0
        %1200 = vmatprep.subr.mxu0 0.0
        %1201 = vmatpush1.msra.mxu0 0.0
        %1202 = vmatprep.subr.mxu0 0.0
        %1203 = vmatpush1.msra.mxu0 0.0
        %1204 = vmatprep.subr.mxu0 0.0
        %1205 = vmatpush1.msra.mxu0 0.0
        %1206 = vmatprep.subr.mxu0 0.0
        %1207 = vmatpush1.msra.mxu0 0.0
        %1208 = vmatprep.subr.mxu0 0.0
        %1209 = vmatpush1.msra.mxu0 0.0
        %1210 = vmatprep.subr.mxu0 0.0
        %1211 = vmatpush1.msra.mxu0 0.0
        %1212 = vmatprep.subr.mxu0 0.0
        %1213 = vmatpush1.msra.mxu0 0.0
        %1214 = vmatprep.subr.mxu0 0.0
        %1215 = vmatpush1.msra.mxu0 0.0
        %1216 = vmatprep.subr.mxu0 0.0
        %1217 = vmatpush1.msra.mxu0 0.0
        %1218 = vmatprep.subr.mxu0 0.0
        %1219 = vmatpush1.msra.mxu0 0.0
        %1220 = vmatprep.subr.mxu0 0.0
        %1221 = vmatpush1.msra.mxu0 0.0
        %1222 = vmatprep.subr.mxu0 0.0
        %1223 = vmatpush1.msra.mxu0 0.0
        %1224 = vmatprep.subr.mxu0 0.0
        %1225 = vmatpush1.msra.mxu0 0.0
        %1226 = vmatprep.subr.mxu0 0.0
        %1227 = vmatpush1.msra.mxu0 0.0
        %1228 = vmatprep.subr.mxu0 0.0
        %1229 = vmatpush1.msra.mxu0 0.0
        %1230 = vmatprep.subr.mxu0 0.0
        %1231 = vmatpush1.msra.mxu0 0.0
        %1232 = vmatprep.mubr.f32.mxu0 0.0
        %1233 = vmatmul.mubr.f32.gmra.mrb[0].mxu0 %v1166
        %v1234 = vpop.f32.mrb[0].mxu0
        %v1235 = vadd.f32 0.0, %v1234
        %v1236 = vpop.f32.mrb[0].mxu0
        %1237 = vdwg.mxu0
        %v1239 = vsel %vm364, %v1012, 0
        %1241 = vmatprep.subr.mxu0 0.0
        %1242 = vmatpush1.msra.mxu0 %v1018
        %1243 = vmatprep.subr.mxu0 0.0
        %1244 = vmatpush1.msra.mxu0 0.0
        %1245 = vmatprep.subr.mxu0 0.0
        %1246 = vmatpush1.msra.mxu0 0.0
        %1247 = vmatprep.subr.mxu0 0.0
        %1248 = vmatpush1.msra.mxu0 0.0
        %1249 = vmatprep.subr.mxu0 0.0
        %1250 = vmatpush1.msra.mxu0 0.0
        %1251 = vmatprep.subr.mxu0 0.0
        %1252 = vmatpush1.msra.mxu0 0.0
        %1253 = vmatprep.subr.mxu0 0.0
        %1254 = vmatpush1.msra.mxu0 0.0
        %1255 = vmatprep.subr.mxu0 0.0
        %1256 = vmatpush1.msra.mxu0 0.0
        %1257 = vmatprep.subr.mxu0 0.0
        %1258 = vmatpush1.msra.mxu0 0.0
        %1259 = vmatprep.subr.mxu0 0.0
        %1260 = vmatpush1.msra.mxu0 0.0
        %1261 = vmatprep.subr.mxu0 0.0
        %1262 = vmatpush1.msra.mxu0 0.0
        %1263 = vmatprep.subr.mxu0 0.0
        %1264 = vmatpush1.msra.mxu0 0.0
        %1265 = vmatprep.subr.mxu0 0.0
        %1266 = vmatpush1.msra.mxu0 0.0
        %1267 = vmatprep.subr.mxu0 0.0
        %1268 = vmatpush1.msra.mxu0 0.0
        %1269 = vmatprep.subr.mxu0 0.0
        %1270 = vmatpush1.msra.mxu0 0.0
        %1271 = vmatprep.subr.mxu0 0.0
        %1272 = vmatpush1.msra.mxu0 0.0
        %1273 = vmatprep.subr.mxu0 0.0
        %1274 = vmatpush1.msra.mxu0 0.0
        %1275 = vmatprep.subr.mxu0 0.0
        %1276 = vmatpush1.msra.mxu0 0.0
        %1277 = vmatprep.subr.mxu0 0.0
        %1278 = vmatpush1.msra.mxu0 0.0
        %1279 = vmatprep.subr.mxu0 0.0
        %1280 = vmatpush1.msra.mxu0 0.0
        %1281 = vmatprep.subr.mxu0 0.0
        %1282 = vmatpush1.msra.mxu0 0.0
        %1283 = vmatprep.subr.mxu0 0.0
        %1284 = vmatpush1.msra.mxu0 0.0
        %1285 = vmatprep.subr.mxu0 0.0
        %1286 = vmatpush1.msra.mxu0 0.0
        %1287 = vmatprep.subr.mxu0 0.0
        %1288 = vmatpush1.msra.mxu0 0.0
        %1289 = vmatprep.subr.mxu0 0.0
        %1290 = vmatpush1.msra.mxu0 0.0
        %1291 = vmatprep.subr.mxu0 0.0
        %1292 = vmatpush1.msra.mxu0 0.0
        %1293 = vmatprep.subr.mxu0 0.0
        %1294 = vmatpush1.msra.mxu0 0.0
        %1295 = vmatprep.subr.mxu0 0.0
        %1296 = vmatpush1.msra.mxu0 0.0
        %1297 = vmatprep.subr.mxu0 0.0
        %1298 = vmatpush1.msra.mxu0 0.0
        %1299 = vmatprep.subr.mxu0 0.0
        %1300 = vmatpush1.msra.mxu0 0.0
        %1301 = vmatprep.subr.mxu0 0.0
        %1302 = vmatpush1.msra.mxu0 0.0
        %1303 = vmatprep.subr.mxu0 0.0
        %1304 = vmatpush1.msra.mxu0 0.0
        %1305 = vmatprep.mubr.f32.mxu0 0.0
        %1306 = vmatmul.mubr.f32.gmra.mrb[0].mxu0 %v1239
        %v1307 = vpop.f32.mrb[0].mxu0
        %v1308 = vadd.f32 0.0, %v1307
        %v1309 = vpop.f32.mrb[0].mxu0
        %1310 = vdwg.mxu0
        %v1311 = vadd.f32 %v1089, %v1162
        %v1312 = vadd.f32 %v1311, %v1235
        %v1313 = vadd.f32 %v1312, %v1308
        %v1314 = vld [vmem:[%s4] sm:$0x1]
        %v1316 = vlaneseq
        %v1317 = vshrl.u32 %v1316, 7
        %v1318 = vsub.s32 0, %v1317
        %v1319 = vrot.slane %v1314, %v1318
        %v1321 = vadd.f32 %v1313, %v1319
        %1322 = vst.msk [vmem:[%s268] sm:$0xff] %vm281, %v1321
        %s1323 = sand.u32 %s141, 1
        %s1324 = scalar_lea.sflag [#allocation4], %s1323
        %s1325 = sand.u32 %s141, 1
        %s1326 = smul.addr %s1325, 8
        %s1327 = scalar_lea.vmem [#allocation8], %s1326
        // Predicated region
        $region53: #{tpu_custom_call.1} parent=39 // pred_check
          %p1328 = pneg %p151
        $region54: #{tpu_custom_call.1} parent=39 // pred_check_branch
          %1330 = sbr.rel (%p1328) target = $region56
        $region55: #{tpu_custom_call.1} parent=39 // pred_region
          %s1332 = ssub.s32 128, 128
          %1333 = vsyncadd %s1324, %s1332
          %s1334 = smul.addr %s23, 128
          %s1335 = scalar_lea.hbm %s5, %s1334
          %s1337 = sshll.u32 %s1327, 4
          %s1338 = int_to_ptr.vmem [resolvable:$true] %s1337
          %1340 = dma.vmem_to_hbm [thread:$0]  %s1338, 128, %s1335, %s1324
        $region56: #{tpu_custom_call.1} parent=39 // pred_fallthru
          _
      $region40: #{tpu_custom_call.1} parent=5 // pred_fallthru
        _
      %p1341 = scmp.le.s32.totalorder 2, %s18
      // Predicated region
      $region57: #{tpu_custom_call.1} parent=5 // pred_check
        %p1342 = pneg %p1341
      $region58: #{tpu_custom_call.1} parent=5 // pred_check_branch
        %1344 = sbr.rel (%p1342) target = $region60
      $region59: #{tpu_custom_call.1} parent=5 // pred_region
        %s1345 = ssub.s32 %s18, 2
        // Predicated region
        $region61: #{tpu_custom_call.1} parent=59 // pred_check
          %p1346 = pneg %p157
        $region62: #{tpu_custom_call.1} parent=59 // pred_check_branch
          %1348 = sbr.rel (%p1346) target = $region64
        $region63: #{tpu_custom_call.1} parent=59 // pred_region
          %s1349 = sand.u32 %s142, 1
          %s1350 = scalar_lea.sflag [#allocation4], %s1349
          %s1351 = sand.u32 %s142, 1
          %s1352 = smul.addr %s1351, 8
          %s1353 = scalar_lea.vmem [#allocation8], %s1352
          %1354 = dma.done %s1350, 128
        $region64: #{tpu_custom_call.1} parent=59 // pred_fallthru
          _
      $region60: #{tpu_custom_call.1} parent=5 // pred_fallthru
        _
    $region6: #{tpu_custom_call.1} parent=1 // loop_footer
      %s22 = sadd.s32 1, %s18
    $region7: #{tpu_custom_call.1} parent=1 // loop_footer_branch
      %17 = sbr.rel target = $region3
    $region8: #{tpu_custom_call.1} parent=1 // loop_exit
      _
    %1355 = vsyncpa [#allocation3], 1
    %s1356 = scalar_lea.sflag [#allocation3], 1
    %1357 = vsyncpa %s1356, 1
    %1358 = vsyncpa [#allocation6], 1
    %1359 = vsyncpa [#allocation4], 1
    %s1360 = scalar_lea.sflag [#allocation4], 1
    %1361 = vsyncpa %s1360, 1

</llo_original>
